<compile_context>
chip_gen: v5e
topology: v5e:2x2
jax: 0.10.0
libtpu: 0.0.40
codegen_flags: <defaults>
</compile_context>

<pallas_src>
import functools

import jax
import jax.numpy as jnp
from jax.experimental import pallas as pl
from jax.experimental.pallas import tpu as pltpu


def _upscale_kernel(x_ref, o_ref, *, factor, gain):
    """x_ref: (TB, TH, W) input tile; o_ref: (TB, TH, F*W*F) output tile.

    The output array is laid out as (N*C, H, F*W*F), row-major identical to
    (N*C, H*F, W*F): for input row r, its F upsampled replicas occupy F
    consecutive chunks of W*F lanes.  Every intermediate stays lane-sized
    (last dim >= W) -- no temp with a `factor`-minor dim is formed -- and the
    store is one lane-dense block write, so the XLU/VPU work stays hidden
    under the HBM writeback DMA (output bytes = f^2 x input bytes).
    """
    x = x_ref[...]
    if gain != 1:
        # Applied before replication (1/f^2 the VPU work of doing it after).
        # TODO(synk): integer inputs with fractional gain truncate here
        # (PyTorch would promote to float); fine for the float feature maps
        # this module operates on.
        x = x * jnp.asarray(gain, dtype=x.dtype)
    if factor > 1:
        # W interleave: (TB, TH, W) -> (TB, TH, W*F) lane replication.
        y = jnp.repeat(x, factor, axis=-1)
        # H replication: the F row-copies are contiguous lane chunks of the
        # flat output row -> plain lane concatenation, dense stores.
        o_ref[...] = jnp.concatenate([y] * factor, axis=-1)
    else:
        o_ref[...] = x


def _vmem_budget():
    """Generation-aware (vmem_limit_bytes, target output-block bytes)."""
    try:
        cap = int(pltpu.get_tpu_info().vmem_capacity_bytes)
    except Exception:  # conservative fallback if the query is unavailable
        cap = 64 * 1024 * 1024
    if cap >= 96 * 1024 * 1024:
        # v4/v5e/v6e: 128 MiB physical VMEM, <=1.4 TB/s HBM -> big slabs to
        # amortize the ~0.35us fixed per-grid-step overhead.
        return 64 * 1024 * 1024, 14 * 1024 * 1024
    if cap >= 48 * 1024 * 1024:
        # v7x: 64 MiB VMEM, 3.2 TB/s HBM. ~10 MiB output blocks keep per-step
        # overhead at a few % while the double-buffered footprint
        # (~2.5x the output block for f=2) stays well under 64 MiB.
        return 44 * 1024 * 1024, 10 * 1024 * 1024
    # Small / unknown VMEM: stay well inside whatever was reported.
    limit = max(8 * 1024 * 1024, (cap * 3) // 4)
    return limit, max(1 * 1024 * 1024, limit // 4)


def _choose_tiles(nc, h, w, f, itemsize, target_out_bytes, sublane):
    """Pick (TB over N*C, TH over H) so the OUTPUT block is ~target bytes.

    TH is a multiple of `sublane` (dtype-aware) or the full H extent; blocks
    need not divide the array (Pallas masks ragged edge blocks); the grid is
    kept >= 2 steps when possible so both v7x TensorCores get work.
    """
    out_row_bytes = f * w * f * itemsize            # output bytes per input row
    max_rows = max(1, int(target_out_bytes // out_row_bytes))
    if h <= max_rows:
        th = h
    else:
        th = min(h, max(sublane, (max_rows // sublane) * sublane))

    per_item = th * out_row_bytes
    tb = max(1, min(nc, int(target_out_bytes // max(1, per_item))))

    def _steps(tb_, th_):
        return -(-nc // tb_) * -(-h // th_)

    while _steps(tb, th) < 2:
        if tb > 1:
            tb = (tb + 1) // 2
        elif th == h and h >= 2 * sublane:
            th = (h // 2) // sublane * sublane      # multiple of sublane, >=2 steps
        else:
            break
    return tb, th


def upscale2d(x, factor=2, gain=1):
    """Pallas TPU equivalent of Upscale2d.forward for NCHW input `x`."""
    assert x.ndim == 4, "expected NCHW input"
    n, c, h, w = x.shape
    f = int(factor)

    # Fast path: no upsample -> no kernel launch / HBM round-trip needed.
    if f <= 1:
        return x if gain == 1 else x * jnp.asarray(gain, dtype=x.dtype)

    # Merge N and C (free reshape) and flatten the f H-replicas into the lane
    # dim of the output: (nc, h, f*w*f) is row-major identical to
    # (nc, h*f, w*f), so the final reshape back is free too.
    # TODO(synk): for very small W (f*w*f < 128) folding several H rows into
    # the lane dim would make the stores fully unmasked; skipped for clarity.
    nc = n * c
    x2 = x.reshape(nc, h, w)

    itemsize = jnp.dtype(x.dtype).itemsize
    sublane = max(8, 32 // max(1, itemsize))        # 8 f32 / 16 bf16 / 32 int8
    vmem_limit, target_out = _vmem_budget()
    tb, th = _choose_tiles(nc, h, w, f, itemsize, target_out, sublane)
    grid = (pl.cdiv(nc, tb), pl.cdiv(h, th))

    in_bytes = x.size * itemsize
    out_bytes = in_bytes * f * f
    cost = pl.CostEstimate(
        flops=(x.size if gain != 1 else 0),
        transcendentals=0,
        bytes_accessed=in_bytes + out_bytes,
    )

    kernel = functools.partial(_upscale_kernel, factor=f, gain=gain)
    out_flat = pl.pallas_call(
        kernel,
        out_shape=jax.ShapeDtypeStruct((nc, h, f * w * f), x.dtype),
        grid_spec=pltpu.PrefetchScalarGridSpec(
            num_scalar_prefetch=0,
            grid=grid,
            in_specs=[pl.BlockSpec((tb, th, w), lambda b, hi: (b, hi, 0))],
            out_specs=pl.BlockSpec((tb, th, f * w * f), lambda b, hi: (b, hi, 0)),
        ),
        compiler_params=pltpu.CompilerParams(
            dimension_semantics=("parallel", "parallel"),
            vmem_limit_bytes=vmem_limit,
        ),
        cost_estimate=cost,
    )(x2)

    # Free split of the flat layout back to (N, C, H*f, W*f).
    return out_flat.reshape(n, c, h * f, w * f)


def _reference_upscale2d(x, factor=2, gain=1):
    # Pure-JAX reference mirroring the PyTorch forward exactly.
    if gain != 1:
        x = x * gain
    if factor > 1:
        n, c, h, w = x.shape
        x = jnp.broadcast_to(
            x.reshape(n, c, h, 1, w, 1), (n, c, h, factor, w, factor)
        ).reshape(n, c, h * factor, w * factor)
    return x


if __name__ == "__main__":
    key = jax.random.PRNGKey(0)
    x = jax.random.normal(key, (2, 4, 16, 16), dtype=jnp.float32)

    # Module defaults: Upscale2d(factor=2, gain=1).
    out = jax.block_until_ready(upscale2d(x, factor=2, gain=1))
    ref = _reference_upscale2d(x, factor=2, gain=1)
    assert out.shape == (2, 4, 32, 32), out.shape
    assert jnp.allclose(out, ref), "mismatch vs reference (factor=2, gain=1)"

    # Non-unit gain path.
    out2 = jax.block_until_ready(upscale2d(x, factor=2, gain=2.0))
    ref2 = _reference_upscale2d(x, factor=2, gain=2.0)
    assert jnp.allclose(out2, ref2), "mismatch vs reference (gain=2)"

    # Non-power-of-two factor.
    out3 = jax.block_until_ready(upscale2d(x, factor=3, gain=1))
    ref3 = _reference_upscale2d(x, factor=3, gain=1)
    assert out3.shape == (2, 4, 48, 48), out3.shape
    assert jnp.allclose(out3, ref3), "mismatch vs reference (factor=3)"

    # Ragged / non-divisible shape (exercises cdiv grid + edge-block masking).
    x_odd = jax.random.normal(jax.random.PRNGKey(1), (1, 3, 17, 24), dtype=jnp.float32)
    out5 = jax.block_until_ready(upscale2d(x_odd, factor=2, gain=1))
    ref5 = _reference_upscale2d(x_odd, factor=2, gain=1)
    assert out5.shape == (1, 3, 34, 48), out5.shape
    assert jnp.allclose(out5, ref5), "mismatch vs reference (ragged shape)"

    # factor==1 fast path (no kernel launch).
    out4 = jax.block_until_ready(upscale2d(x, factor=1, gain=2.0))
    assert jnp.allclose(out4, x * 2.0), "mismatch vs reference (factor=1)"

    print("KERNEL_OK")
</pallas_src>

<mosaic_0001>
module attributes {stable_mosaic.version = 11 : i64} {
  func.func @_upscale_kernel(%arg0: i32, %arg1: i32, %arg2: memref<4x16x16xf32, #tpu.memory_space<vmem>>, %arg3: memref<4x16x64xf32, #tpu.memory_space<vmem>>) attributes {dimension_semantics = [#tpu.dimension_semantics<parallel>, #tpu.dimension_semantics<parallel>], iteration_bounds = array<i64: 2, 1>, scalar_prefetch = 0 : i64, scratch_operands = 0 : i64, tpu.core_type = #tpu.core_type<tc>, window_params = [{transform_indices = @transform_0, window_bounds = array<i64: 4, 16, 16>}, {transform_indices = @transform_1, window_bounds = array<i64: 4, 16, 64>}]} {
    %c0 = arith.constant 0 : index
    %c0_0 = arith.constant 0 : index
    %c0_1 = arith.constant 0 : index
    %0 = vector.load %arg2[%c0, %c0_0, %c0_1] : memref<4x16x16xf32, #tpu.memory_space<vmem>>, vector<4x16x16xf32>
    %1 = vector.shape_cast %0 : vector<4x16x16xf32> to vector<4x16x16x1xf32>
    %2 = vector.broadcast %1 : vector<4x16x16x1xf32> to vector<4x16x16x2xf32>
    %3 = vector.shape_cast %2 : vector<4x16x16x2xf32> to vector<4x16x32xf32>
    %4 = tpu.concatenate %3, %3 in 2 : vector<4x16x32xf32>, vector<4x16x32xf32> -> vector<4x16x64xf32>
    %c0_2 = arith.constant 0 : index
    %c0_3 = arith.constant 0 : index
    %c0_4 = arith.constant 0 : index
    %5 = vector.load %arg3[%c0_2, %c0_3, %c0_4] : memref<4x16x64xf32, #tpu.memory_space<vmem>>, vector<4x16x64xf32>
    tpu.vector_store %arg3[%c0_2, %c0_3, %c0_4], %4 {strides = array<i32>} : memref<4x16x64xf32, #tpu.memory_space<vmem>>, vector<4x16x64xf32>,
    return
  }
  func.func @transform_0(%arg0: i32, %arg1: i32) -> (i32, i32, i32) {
    %c0_i32 = arith.constant 0 : i32
    %c0_i32_0 = arith.constant 0 : i32
    return %arg0, %arg1, %c0_i32 : i32, i32, i32
  }
  func.func @transform_1(%arg0: i32, %arg1: i32) -> (i32, i32, i32) {
    %c0_i32 = arith.constant 0 : i32
    %c0_i32_0 = arith.constant 0 : i32
    return %arg0, %arg1, %c0_i32 : i32, i32, i32
  }
}

</mosaic_0001>

<llo_original>
// kernel: tpu_custom_call.1
$region0: #{tpu_custom_call.1}
  #allocation0 [shape = 'u32[]', space=smem, size = 0x4, offset = 0x4, fixed_abs, tag = 'smem constant byte address 0x4 - core index']
  #allocation1 [shape = 'u32[72,128]{1,0:T(1,128)}', space=vmem, size = 0x9000, scoped, tag = 'internal scratch']
  %s0 = inlined_call_operand.hbm [shape: f32[8,16,16], index: 0, kind: input, shape index: {}]
  %s1 = inlined_call_operand.hbm [shape: f32[8,16,64], index: 1, kind: output, shape index: {}]
  %s2 = sld [smem:[#allocation0]]
  $region41: #{tpu_custom_call.1} parent=0
    _
  %s4 = ssub.s32 1, %s2
  %s5 = scalar_select 0, %s4, %s2
  $region1: #{tpu_custom_call.1} parent=0
    #allocation2 [shape = 'u8[65536]{0}', space=vmem, size = 0x10000, scoped, tag = 'input window, operand 0']
    #allocation3 [shape = 's32[2]{0}', space=sflag, size = 0x8, scoped, tag = 'scoped memory for tpu_custom_call.1']
    #allocation4 [shape = 's32[2]{0}', space=sflag, size = 0x8, scoped, tag = 'scoped memory for tpu_custom_call.1']
    #allocation5 [shape = 'u8[65536]{0}', space=vmem, size = 0x10000, scoped, tag = 'output window, operand 0']
    %6 = vsyncpa [#allocation3], 0
    %s7 = scalar_lea.sflag [#allocation3], 1
    %8 = vsyncpa %s7, 0
    %9 = vsyncpa [#allocation4], 0
    %s10 = scalar_lea.sflag [#allocation4], 1
    %11 = vsyncpa %s10, 0
    loop: start=0, step=1, limit=4
    $region2: #{tpu_custom_call.1} parent=1 // loop_pre_header
      _
    $region3: #{tpu_custom_call.1} parent=1 // loop_header
      %s13 = sphi 0, %s17
      %p14 = scmp.ge.s32.totalorder %s13, 4
      %s20 = sphi 0, %s32
      %s21 = sphi 0, %s28
      %s22 = sphi 0, %s20
      %s23 = sphi 0, %s21
      %s24 = sphi 0, %s22
      %s25 = sphi 0, %s23
      %s37 = sphi 0, %s39
      %s40 = sphi 0, %s37
      %s41 = sphi 0, %s40
      %s57 = sphi 0, %s41
      %s65 = sphi 0, %s67
      %s68 = sphi 0, %s65
      %s69 = sphi 0, %s68
      %s85 = sphi 0, %s69
    $region4: #{tpu_custom_call.1} parent=1 // loop_header_branch
      %16 = sbr.rel (%p14) target = $region8
    $region5: #{tpu_custom_call.1} parent=1 // loop_body
      %s18 = ssub.s32 %s13, 1
      %s19 = ssub.s32 %s13, 2
      %s26 = sadd.s32 1, %s21
      %p27 = scmp.ge.s32.totalorder %s26, 1
      %s28 = scalar_select %p27, 0, %s26
      %s29 = sadd.s32 1, %s20
      %s30 = scalar_select %p27, %s29, %s20
      %p31 = scmp.ge.s32.totalorder %s30, 2
      %s32 = scalar_select %p31, 0, %s30
      %s33 = ssub.s32 %s20, %s32
      %s34 = ssub.s32 %s21, %s28
      %s35 = sor.u32 %s33, %s34
      %p36 = scmp.eq.s32.totalorder %s35, 0
      %s38 = sadd.s32 %s37, 1
      %s39 = scalar_select %p36, %s37, %s38
      %p42 = pneg %p36
      %p43 = scmp.eq.s32.totalorder %s13, 1
      %p44 = por %p42, %p43
      %p45 = scmp.ne.s32.totalorder %s37, %s40
      %p46 = scmp.eq.s32.totalorder %s13, 0
      %p47 = por %p45, %p46
      %p48 = scmp.ne.s32.totalorder %s37, %s40
      %p49 = scmp.eq.s32.totalorder %s18, 1
      %p50 = por %p48, %p49
      %p51 = scmp.ne.s32.totalorder %s40, %s41
      %p52 = scmp.eq.s32.totalorder %s18, 0
      %p53 = por %p51, %p52
      %p54 = scmp.ne.s32.totalorder %s40, %s41
      %p55 = scmp.eq.s32.totalorder %s19, 1
      %p56 = por %p54, %p55
      %p58 = scmp.ne.s32.totalorder %s41, %s57
      %p59 = scmp.eq.s32.totalorder %s19, 0
      %p60 = por %p58, %p59
      %s61 = ssub.s32 %s20, %s32
      %s62 = ssub.s32 %s21, %s28
      %s63 = sor.u32 %s61, %s62
      %p64 = scmp.eq.s32.totalorder %s63, 0
      %s66 = sadd.s32 %s65, 1
      %s67 = scalar_select %p64, %s65, %s66
      %p70 = pneg %p64
      %p71 = scmp.eq.s32.totalorder %s13, 1
      %p72 = por %p70, %p71
      %p73 = scmp.ne.s32.totalorder %s65, %s68
      %p74 = scmp.eq.s32.totalorder %s13, 0
      %p75 = por %p73, %p74
      %p76 = scmp.ne.s32.totalorder %s65, %s68
      %p77 = scmp.eq.s32.totalorder %s18, 1
      %p78 = por %p76, %p77
      %p79 = scmp.ne.s32.totalorder %s68, %s69
      %p80 = scmp.eq.s32.totalorder %s18, 0
      %p81 = por %p79, %p80
      %p82 = scmp.ne.s32.totalorder %s68, %s69
      %p83 = scmp.eq.s32.totalorder %s19, 1
      %p84 = por %p82, %p83
      %p86 = scmp.ne.s32.totalorder %s69, %s85
      %p87 = scmp.eq.s32.totalorder %s19, 0
      %p88 = por %p86, %p87
      %p89 = scmp.le.s32.totalorder 1, %s13
      %p90 = scmp.lt.s32.totalorder %s13, 3
      %p91 = pnand %p89, %p90
      %p92 = pneg %p91
      // Predicated region
      $region9: #{tpu_custom_call.1} parent=5 // pred_check
        _
      $region10: #{tpu_custom_call.1} parent=5 // pred_check_branch
        %94 = sbr.rel (%p91) target = $region12
      $region11: #{tpu_custom_call.1} parent=5 // pred_region
        %s95 = ssub.s32 %s13, 1
      $region12: #{tpu_custom_call.1} parent=5 // pred_fallthru
        _
      %p96 = scmp.lt.s32.totalorder %s13, 2
      // Predicated region
      $region13: #{tpu_custom_call.1} parent=5 // pred_check
        %p97 = pneg %p96
      $region14: #{tpu_custom_call.1} parent=5 // pred_check_branch
        %99 = sbr.rel (%p97) target = $region16
      $region15: #{tpu_custom_call.1} parent=5 // pred_region
        // Predicated region
        $region17: #{tpu_custom_call.1} parent=15 // pred_check
          %p100 = pneg %p47
        $region18: #{tpu_custom_call.1} parent=15 // pred_check_branch
          %102 = sbr.rel (%p100) target = $region20
        $region19: #{tpu_custom_call.1} parent=15 // pred_region
          %s103 = sand.u32 %s37, 1
          %s104 = scalar_lea.sflag [#allocation3], %s103
          %s105 = sand.u32 %s37, 1
          %s106 = smul.addr %s105, 64
          %s107 = scalar_lea.vmem [#allocation2], %s106
          %s108 = smul.u32 4, %s20
          %s109 = smul.u32 2, %s21
          %111 = vsyncadd %s104, 0
          %s112 = smul.addr %s108, 2
          %s113 = sadd.s32 %s109, %s112
          %s114 = smul.addr %s113, 8
          %s115 = scalar_lea.hbm %s0, %s114
          %s116 = sshll.u32 %s115, 4
          %s117 = int_to_ptr.hbm [resolvable:$true] %s116
          %s118 = sshll.u32 %s107, 4
          %s119 = int_to_ptr.vmem [resolvable:$true] %s118
          %124 = dma.hbm_to_vmem [thread:$0]  %s117, 1024, %s119, %s104, 128, 128, 8
        $region20: #{tpu_custom_call.1} parent=15 // pred_fallthru
          _
      $region16: #{tpu_custom_call.1} parent=5 // pred_fallthru
        _
      %p125 = scmp.le.s32.totalorder 1, %s13
      %p126 = scmp.lt.s32.totalorder %s13, 3
      %p127 = pnand %p125, %p126
      %p128 = pneg %p127
      // Predicated region
      $region21: #{tpu_custom_call.1} parent=5 // pred_check
        _
      $region22: #{tpu_custom_call.1} parent=5 // pred_check_branch
        %130 = sbr.rel (%p127) target = $region24
      $region23: #{tpu_custom_call.1} parent=5 // pred_region
        %s131 = ssub.s32 %s13, 1
        %s132 = sand.u32 %s40, 1
        %s133 = scalar_lea.sflag [#allocation3], %s132
        %s134 = sand.u32 %s40, 1
        %s135 = smul.addr %s134, 64
        %s136 = scalar_lea.vmem [#allocation2], %s135
        // Predicated region
        $region25: #{tpu_custom_call.1} parent=23 // pred_check
          %p137 = pneg %p53
        $region26: #{tpu_custom_call.1} parent=23 // pred_check_branch
          %139 = sbr.rel (%p137) target = $region28
        $region27: #{tpu_custom_call.1} parent=23 // pred_region
          %141 = dma.done %s133, 1024
        $region28: #{tpu_custom_call.1} parent=23 // pred_fallthru
          _
        %s142 = sand.u32 %s40, 1
        %s143 = scalar_lea.sflag [#allocation3], %s142
        %s144 = sand.u32 %s40, 1
        %s145 = smul.addr %s144, 64
        %s146 = scalar_lea.vmem [#allocation2], %s145
        %p147 = pneg %p53
        %p148 = pneg %p50
        %p149 = pneg %p81
        %p150 = pneg %p78
        %s151 = sand.u32 %s68, 1
        %s152 = scalar_lea.sflag [#allocation4], %s151
        %s153 = sand.u32 %s68, 1
        %s154 = smul.addr %s153, 64
        %s155 = scalar_lea.vmem [#allocation5], %s154
        %s156 = smul.u32 4, %s22
        %s157 = smul.u32 2, %s23
        %s158 = smul.u32 4, %s22
        %s159 = smul.u32 2, %s23
        %v160 = vld [vmem:[%s136] sm:$0xff]
        %v161 = vld [vmem:[%s136 + $0x8] sm:$0xff]
        %v162 = vld [vmem:[%s136 + $0x10] sm:$0xff]
        %v163 = vld [vmem:[%s136 + $0x18] sm:$0xff]
        %v164 = vld [vmem:[%s136 + $0x20] sm:$0xff]
        %v165 = vld [vmem:[%s136 + $0x28] sm:$0xff]
        %v166 = vld [vmem:[%s136 + $0x30] sm:$0xff]
        %v167 = vld [vmem:[%s136 + $0x38] sm:$0xff]
        %v168 = vperm.slane %v160, 0
        %v169 = vlaneseq
        %v170 = vshrl.u32 %v169, 7
        %172 = vset.pattern.permute.xlu0 %v170
        %173 = vperm.xlu0 %172, %v168
        %v174 = vpop.permute.xlu0 %173
        %v175 = vlaneseq
        %v176 = vshrl.u32 %v175, 7
        %v177 = vadd.s32 %v176, 8
        %178 = vset.pattern.permute.xlu0 %v177
        %179 = vperm.xlu0 %178, %v168
        %v180 = vpop.permute.xlu0 %179
        %v181 = vperm.slane %v160, 1
        %v182 = vlaneseq
        %v183 = vshrl.u32 %v182, 7
        %185 = vset.pattern.permute.xlu0 %v183
        %186 = vperm.xlu0 %185, %v181
        %v187 = vpop.permute.xlu0 %186
        %v188 = vlaneseq
        %v189 = vshrl.u32 %v188, 7
        %v190 = vadd.s32 %v189, 8
        %191 = vset.pattern.permute.xlu0 %v190
        %192 = vperm.xlu0 %191, %v181
        %v193 = vpop.permute.xlu0 %192
        %v194 = vperm.slane %v160, 2
        %v195 = vlaneseq
        %v196 = vshrl.u32 %v195, 7
        %198 = vset.pattern.permute.xlu0 %v196
        %199 = vperm.xlu0 %198, %v194
        %v200 = vpop.permute.xlu0 %199
        %v201 = vlaneseq
        %v202 = vshrl.u32 %v201, 7
        %v203 = vadd.s32 %v202, 8
        %204 = vset.pattern.permute.xlu0 %v203
        %205 = vperm.xlu0 %204, %v194
        %v206 = vpop.permute.xlu0 %205
        %v207 = vperm.slane %v160, 3
        %v208 = vlaneseq
        %v209 = vshrl.u32 %v208, 7
        %211 = vset.pattern.permute.xlu0 %v209
        %212 = vperm.xlu0 %211, %v207
        %v213 = vpop.permute.xlu0 %212
        %v214 = vlaneseq
        %v215 = vshrl.u32 %v214, 7
        %v216 = vadd.s32 %v215, 8
        %217 = vset.pattern.permute.xlu0 %v216
        %218 = vperm.xlu0 %217, %v207
        %v219 = vpop.permute.xlu0 %218
        %v220 = vperm.slane %v160, 4
        %v221 = vlaneseq
        %v222 = vshrl.u32 %v221, 7
        %224 = vset.pattern.permute.xlu0 %v222
        %225 = vperm.xlu0 %224, %v220
        %v226 = vpop.permute.xlu0 %225
        %v227 = vlaneseq
        %v228 = vshrl.u32 %v227, 7
        %v229 = vadd.s32 %v228, 8
        %230 = vset.pattern.permute.xlu0 %v229
        %231 = vperm.xlu0 %230, %v220
        %v232 = vpop.permute.xlu0 %231
        %v233 = vperm.slane %v160, 5
        %v234 = vlaneseq
        %v235 = vshrl.u32 %v234, 7
        %237 = vset.pattern.permute.xlu0 %v235
        %238 = vperm.xlu0 %237, %v233
        %v239 = vpop.permute.xlu0 %238
        %v240 = vlaneseq
        %v241 = vshrl.u32 %v240, 7
        %v242 = vadd.s32 %v241, 8
        %243 = vset.pattern.permute.xlu0 %v242
        %244 = vperm.xlu0 %243, %v233
        %v245 = vpop.permute.xlu0 %244
        %v246 = vperm.slane %v160, 6
        %v247 = vlaneseq
        %v248 = vshrl.u32 %v247, 7
        %250 = vset.pattern.permute.xlu0 %v248
        %251 = vperm.xlu0 %250, %v246
        %v252 = vpop.permute.xlu0 %251
        %v253 = vlaneseq
        %v254 = vshrl.u32 %v253, 7
        %v255 = vadd.s32 %v254, 8
        %256 = vset.pattern.permute.xlu0 %v255
        %257 = vperm.xlu0 %256, %v246
        %v258 = vpop.permute.xlu0 %257
        %v259 = vperm.slane %v160, 7
        %v260 = vlaneseq
        %v261 = vshrl.u32 %v260, 7
        %263 = vset.pattern.permute.xlu0 %v261
        %264 = vperm.xlu0 %263, %v259
        %v265 = vpop.permute.xlu0 %264
        %v266 = vlaneseq
        %v267 = vshrl.u32 %v266, 7
        %v268 = vadd.s32 %v267, 8
        %269 = vset.pattern.permute.xlu0 %v268
        %270 = vperm.xlu0 %269, %v259
        %v271 = vpop.permute.xlu0 %270
        %v272 = vperm.slane %v161, 0
        %v273 = vlaneseq
        %v274 = vshrl.u32 %v273, 7
        %276 = vset.pattern.permute.xlu0 %v274
        %277 = vperm.xlu0 %276, %v272
        %v278 = vpop.permute.xlu0 %277
        %v279 = vlaneseq
        %v280 = vshrl.u32 %v279, 7
        %v281 = vadd.s32 %v280, 8
        %282 = vset.pattern.permute.xlu0 %v281
        %283 = vperm.xlu0 %282, %v272
        %v284 = vpop.permute.xlu0 %283
        %v285 = vperm.slane %v161, 1
        %v286 = vlaneseq
        %v287 = vshrl.u32 %v286, 7
        %289 = vset.pattern.permute.xlu0 %v287
        %290 = vperm.xlu0 %289, %v285
        %v291 = vpop.permute.xlu0 %290
        %v292 = vlaneseq
        %v293 = vshrl.u32 %v292, 7
        %v294 = vadd.s32 %v293, 8
        %295 = vset.pattern.permute.xlu0 %v294
        %296 = vperm.xlu0 %295, %v285
        %v297 = vpop.permute.xlu0 %296
        %v298 = vperm.slane %v161, 2
        %v299 = vlaneseq
        %v300 = vshrl.u32 %v299, 7
        %302 = vset.pattern.permute.xlu0 %v300
        %303 = vperm.xlu0 %302, %v298
        %v304 = vpop.permute.xlu0 %303
        %v305 = vlaneseq
        %v306 = vshrl.u32 %v305, 7
        %v307 = vadd.s32 %v306, 8
        %308 = vset.pattern.permute.xlu0 %v307
        %309 = vperm.xlu0 %308, %v298
        %v310 = vpop.permute.xlu0 %309
        %v311 = vperm.slane %v161, 3
        %v312 = vlaneseq
        %v313 = vshrl.u32 %v312, 7
        %315 = vset.pattern.permute.xlu0 %v313
        %316 = vperm.xlu0 %315, %v311
        %v317 = vpop.permute.xlu0 %316
        %v318 = vlaneseq
        %v319 = vshrl.u32 %v318, 7
        %v320 = vadd.s32 %v319, 8
        %321 = vset.pattern.permute.xlu0 %v320
        %322 = vperm.xlu0 %321, %v311
        %v323 = vpop.permute.xlu0 %322
        %v324 = vperm.slane %v161, 4
        %v325 = vlaneseq
        %v326 = vshrl.u32 %v325, 7
        %328 = vset.pattern.permute.xlu0 %v326
        %329 = vperm.xlu0 %328, %v324
        %v330 = vpop.permute.xlu0 %329
        %v331 = vlaneseq
        %v332 = vshrl.u32 %v331, 7
        %v333 = vadd.s32 %v332, 8
        %334 = vset.pattern.permute.xlu0 %v333
        %335 = vperm.xlu0 %334, %v324
        %v336 = vpop.permute.xlu0 %335
        %v337 = vperm.slane %v161, 5
        %v338 = vlaneseq
        %v339 = vshrl.u32 %v338, 7
        %341 = vset.pattern.permute.xlu0 %v339
        %342 = vperm.xlu0 %341, %v337
        %v343 = vpop.permute.xlu0 %342
        %v344 = vlaneseq
        %v345 = vshrl.u32 %v344, 7
        %v346 = vadd.s32 %v345, 8
        %347 = vset.pattern.permute.xlu0 %v346
        %348 = vperm.xlu0 %347, %v337
        %v349 = vpop.permute.xlu0 %348
        %v350 = vperm.slane %v161, 6
        %v351 = vlaneseq
        %v352 = vshrl.u32 %v351, 7
        %354 = vset.pattern.permute.xlu0 %v352
        %355 = vperm.xlu0 %354, %v350
        %v356 = vpop.permute.xlu0 %355
        %v357 = vlaneseq
        %v358 = vshrl.u32 %v357, 7
        %v359 = vadd.s32 %v358, 8
        %360 = vset.pattern.permute.xlu0 %v359
        %361 = vperm.xlu0 %360, %v350
        %v362 = vpop.permute.xlu0 %361
        %v363 = vperm.slane %v161, 7
        %v364 = vlaneseq
        %v365 = vshrl.u32 %v364, 7
        %367 = vset.pattern.permute.xlu0 %v365
        %368 = vperm.xlu0 %367, %v363
        %v369 = vpop.permute.xlu0 %368
        %v370 = vlaneseq
        %v371 = vshrl.u32 %v370, 7
        %v372 = vadd.s32 %v371, 8
        %373 = vset.pattern.permute.xlu0 %v372
        %374 = vperm.xlu0 %373, %v363
        %v375 = vpop.permute.xlu0 %374
        %v376 = vperm.slane %v162, 0
        %v377 = vlaneseq
        %v378 = vshrl.u32 %v377, 7
        %380 = vset.pattern.permute.xlu0 %v378
        %381 = vperm.xlu0 %380, %v376
        %v382 = vpop.permute.xlu0 %381
        %v383 = vlaneseq
        %v384 = vshrl.u32 %v383, 7
        %v385 = vadd.s32 %v384, 8
        %386 = vset.pattern.permute.xlu0 %v385
        %387 = vperm.xlu0 %386, %v376
        %v388 = vpop.permute.xlu0 %387
        %v389 = vperm.slane %v162, 1
        %v390 = vlaneseq
        %v391 = vshrl.u32 %v390, 7
        %393 = vset.pattern.permute.xlu0 %v391
        %394 = vperm.xlu0 %393, %v389
        %v395 = vpop.permute.xlu0 %394
        %v396 = vlaneseq
        %v397 = vshrl.u32 %v396, 7
        %v398 = vadd.s32 %v397, 8
        %399 = vset.pattern.permute.xlu0 %v398
        %400 = vperm.xlu0 %399, %v389
        %v401 = vpop.permute.xlu0 %400
        %v402 = vperm.slane %v162, 2
        %v403 = vlaneseq
        %v404 = vshrl.u32 %v403, 7
        %406 = vset.pattern.permute.xlu0 %v404
        %407 = vperm.xlu0 %406, %v402
        %v408 = vpop.permute.xlu0 %407
        %v409 = vlaneseq
        %v410 = vshrl.u32 %v409, 7
        %v411 = vadd.s32 %v410, 8
        %412 = vset.pattern.permute.xlu0 %v411
        %413 = vperm.xlu0 %412, %v402
        %v414 = vpop.permute.xlu0 %413
        %v415 = vperm.slane %v162, 3
        %v416 = vlaneseq
        %v417 = vshrl.u32 %v416, 7
        %419 = vset.pattern.permute.xlu0 %v417
        %420 = vperm.xlu0 %419, %v415
        %v421 = vpop.permute.xlu0 %420
        %v422 = vlaneseq
        %v423 = vshrl.u32 %v422, 7
        %v424 = vadd.s32 %v423, 8
        %425 = vset.pattern.permute.xlu0 %v424
        %426 = vperm.xlu0 %425, %v415
        %v427 = vpop.permute.xlu0 %426
        %v428 = vperm.slane %v162, 4
        %v429 = vlaneseq
        %v430 = vshrl.u32 %v429, 7
        %432 = vset.pattern.permute.xlu0 %v430
        %433 = vperm.xlu0 %432, %v428
        %v434 = vpop.permute.xlu0 %433
        %v435 = vlaneseq
        %v436 = vshrl.u32 %v435, 7
        %v437 = vadd.s32 %v436, 8
        %438 = vset.pattern.permute.xlu0 %v437
        %439 = vperm.xlu0 %438, %v428
        %v440 = vpop.permute.xlu0 %439
        %v441 = vperm.slane %v162, 5
        %v442 = vlaneseq
        %v443 = vshrl.u32 %v442, 7
        %445 = vset.pattern.permute.xlu0 %v443
        %446 = vperm.xlu0 %445, %v441
        %v447 = vpop.permute.xlu0 %446
        %v448 = vlaneseq
        %v449 = vshrl.u32 %v448, 7
        %v450 = vadd.s32 %v449, 8
        %451 = vset.pattern.permute.xlu0 %v450
        %452 = vperm.xlu0 %451, %v441
        %v453 = vpop.permute.xlu0 %452
        %v454 = vperm.slane %v162, 6
        %v455 = vlaneseq
        %v456 = vshrl.u32 %v455, 7
        %458 = vset.pattern.permute.xlu0 %v456
        %459 = vperm.xlu0 %458, %v454
        %v460 = vpop.permute.xlu0 %459
        %v461 = vlaneseq
        %v462 = vshrl.u32 %v461, 7
        %v463 = vadd.s32 %v462, 8
        %464 = vset.pattern.permute.xlu0 %v463
        %465 = vperm.xlu0 %464, %v454
        %v466 = vpop.permute.xlu0 %465
        %v467 = vperm.slane %v162, 7
        %v468 = vlaneseq
        %v469 = vshrl.u32 %v468, 7
        %471 = vset.pattern.permute.xlu0 %v469
        %472 = vperm.xlu0 %471, %v467
        %v473 = vpop.permute.xlu0 %472
        %v474 = vlaneseq
        %v475 = vshrl.u32 %v474, 7
        %v476 = vadd.s32 %v475, 8
        %477 = vset.pattern.permute.xlu0 %v476
        %478 = vperm.xlu0 %477, %v467
        %v479 = vpop.permute.xlu0 %478
        %v480 = vperm.slane %v163, 0
        %v481 = vlaneseq
        %v482 = vshrl.u32 %v481, 7
        %484 = vset.pattern.permute.xlu0 %v482
        %485 = vperm.xlu0 %484, %v480
        %v486 = vpop.permute.xlu0 %485
        %v487 = vlaneseq
        %v488 = vshrl.u32 %v487, 7
        %v489 = vadd.s32 %v488, 8
        %490 = vset.pattern.permute.xlu0 %v489
        %491 = vperm.xlu0 %490, %v480
        %v492 = vpop.permute.xlu0 %491
        %v493 = vperm.slane %v163, 1
        %v494 = vlaneseq
        %v495 = vshrl.u32 %v494, 7
        %497 = vset.pattern.permute.xlu0 %v495
        %498 = vperm.xlu0 %497, %v493
        %v499 = vpop.permute.xlu0 %498
        %v500 = vlaneseq
        %v501 = vshrl.u32 %v500, 7
        %v502 = vadd.s32 %v501, 8
        %503 = vset.pattern.permute.xlu0 %v502
        %504 = vperm.xlu0 %503, %v493
        %v505 = vpop.permute.xlu0 %504
        %v506 = vperm.slane %v163, 2
        %v507 = vlaneseq
        %v508 = vshrl.u32 %v507, 7
        %510 = vset.pattern.permute.xlu0 %v508
        %511 = vperm.xlu0 %510, %v506
        %v512 = vpop.permute.xlu0 %511
        %v513 = vlaneseq
        %v514 = vshrl.u32 %v513, 7
        %v515 = vadd.s32 %v514, 8
        %516 = vset.pattern.permute.xlu0 %v515
        %517 = vperm.xlu0 %516, %v506
        %v518 = vpop.permute.xlu0 %517
        %v519 = vperm.slane %v163, 3
        %v520 = vlaneseq
        %v521 = vshrl.u32 %v520, 7
        %523 = vset.pattern.permute.xlu0 %v521
        %524 = vperm.xlu0 %523, %v519
        %v525 = vpop.permute.xlu0 %524
        %v526 = vlaneseq
        %v527 = vshrl.u32 %v526, 7
        %v528 = vadd.s32 %v527, 8
        %529 = vset.pattern.permute.xlu0 %v528
        %530 = vperm.xlu0 %529, %v519
        %v531 = vpop.permute.xlu0 %530
        %v532 = vperm.slane %v163, 4
        %v533 = vlaneseq
        %v534 = vshrl.u32 %v533, 7
        %536 = vset.pattern.permute.xlu0 %v534
        %537 = vperm.xlu0 %536, %v532
        %v538 = vpop.permute.xlu0 %537
        %v539 = vlaneseq
        %v540 = vshrl.u32 %v539, 7
        %v541 = vadd.s32 %v540, 8
        %542 = vset.pattern.permute.xlu0 %v541
        %543 = vperm.xlu0 %542, %v532
        %v544 = vpop.permute.xlu0 %543
        %v545 = vperm.slane %v163, 5
        %v546 = vlaneseq
        %v547 = vshrl.u32 %v546, 7
        %549 = vset.pattern.permute.xlu0 %v547
        %550 = vperm.xlu0 %549, %v545
        %v551 = vpop.permute.xlu0 %550
        %v552 = vlaneseq
        %v553 = vshrl.u32 %v552, 7
        %v554 = vadd.s32 %v553, 8
        %555 = vset.pattern.permute.xlu0 %v554
        %556 = vperm.xlu0 %555, %v545
        %v557 = vpop.permute.xlu0 %556
        %v558 = vperm.slane %v163, 6
        %v559 = vlaneseq
        %v560 = vshrl.u32 %v559, 7
        %562 = vset.pattern.permute.xlu0 %v560
        %563 = vperm.xlu0 %562, %v558
        %v564 = vpop.permute.xlu0 %563
        %v565 = vlaneseq
        %v566 = vshrl.u32 %v565, 7
        %v567 = vadd.s32 %v566, 8
        %568 = vset.pattern.permute.xlu0 %v567
        %569 = vperm.xlu0 %568, %v558
        %v570 = vpop.permute.xlu0 %569
        %v571 = vperm.slane %v163, 7
        %v572 = vlaneseq
        %v573 = vshrl.u32 %v572, 7
        %575 = vset.pattern.permute.xlu0 %v573
        %576 = vperm.xlu0 %575, %v571
        %v577 = vpop.permute.xlu0 %576
        %v578 = vlaneseq
        %v579 = vshrl.u32 %v578, 7
        %v580 = vadd.s32 %v579, 8
        %581 = vset.pattern.permute.xlu0 %v580
        %582 = vperm.xlu0 %581, %v571
        %v583 = vpop.permute.xlu0 %582
        %v584 = vperm.slane %v164, 0
        %v585 = vlaneseq
        %v586 = vshrl.u32 %v585, 7
        %588 = vset.pattern.permute.xlu0 %v586
        %589 = vperm.xlu0 %588, %v584
        %v590 = vpop.permute.xlu0 %589
        %v591 = vlaneseq
        %v592 = vshrl.u32 %v591, 7
        %v593 = vadd.s32 %v592, 8
        %594 = vset.pattern.permute.xlu0 %v593
        %595 = vperm.xlu0 %594, %v584
        %v596 = vpop.permute.xlu0 %595
        %v597 = vperm.slane %v164, 1
        %v598 = vlaneseq
        %v599 = vshrl.u32 %v598, 7
        %601 = vset.pattern.permute.xlu0 %v599
        %602 = vperm.xlu0 %601, %v597
        %v603 = vpop.permute.xlu0 %602
        %v604 = vlaneseq
        %v605 = vshrl.u32 %v604, 7
        %v606 = vadd.s32 %v605, 8
        %607 = vset.pattern.permute.xlu0 %v606
        %608 = vperm.xlu0 %607, %v597
        %v609 = vpop.permute.xlu0 %608
        %v610 = vperm.slane %v164, 2
        %v611 = vlaneseq
        %v612 = vshrl.u32 %v611, 7
        %614 = vset.pattern.permute.xlu0 %v612
        %615 = vperm.xlu0 %614, %v610
        %v616 = vpop.permute.xlu0 %615
        %v617 = vlaneseq
        %v618 = vshrl.u32 %v617, 7
        %v619 = vadd.s32 %v618, 8
        %620 = vset.pattern.permute.xlu0 %v619
        %621 = vperm.xlu0 %620, %v610
        %v622 = vpop.permute.xlu0 %621
        %v623 = vperm.slane %v164, 3
        %v624 = vlaneseq
        %v625 = vshrl.u32 %v624, 7
        %627 = vset.pattern.permute.xlu0 %v625
        %628 = vperm.xlu0 %627, %v623
        %v629 = vpop.permute.xlu0 %628
        %v630 = vlaneseq
        %v631 = vshrl.u32 %v630, 7
        %v632 = vadd.s32 %v631, 8
        %633 = vset.pattern.permute.xlu0 %v632
        %634 = vperm.xlu0 %633, %v623
        %v635 = vpop.permute.xlu0 %634
        %v636 = vperm.slane %v164, 4
        %v637 = vlaneseq
        %v638 = vshrl.u32 %v637, 7
        %640 = vset.pattern.permute.xlu0 %v638
        %641 = vperm.xlu0 %640, %v636
        %v642 = vpop.permute.xlu0 %641
        %v643 = vlaneseq
        %v644 = vshrl.u32 %v643, 7
        %v645 = vadd.s32 %v644, 8
        %646 = vset.pattern.permute.xlu0 %v645
        %647 = vperm.xlu0 %646, %v636
        %v648 = vpop.permute.xlu0 %647
        %v649 = vperm.slane %v164, 5
        %v650 = vlaneseq
        %v651 = vshrl.u32 %v650, 7
        %653 = vset.pattern.permute.xlu0 %v651
        %654 = vperm.xlu0 %653, %v649
        %v655 = vpop.permute.xlu0 %654
        %v656 = vlaneseq
        %v657 = vshrl.u32 %v656, 7
        %v658 = vadd.s32 %v657, 8
        %659 = vset.pattern.permute.xlu0 %v658
        %660 = vperm.xlu0 %659, %v649
        %v661 = vpop.permute.xlu0 %660
        %v662 = vperm.slane %v164, 6
        %v663 = vlaneseq
        %v664 = vshrl.u32 %v663, 7
        %666 = vset.pattern.permute.xlu0 %v664
        %667 = vperm.xlu0 %666, %v662
        %v668 = vpop.permute.xlu0 %667
        %v669 = vlaneseq
        %v670 = vshrl.u32 %v669, 7
        %v671 = vadd.s32 %v670, 8
        %672 = vset.pattern.permute.xlu0 %v671
        %673 = vperm.xlu0 %672, %v662
        %v674 = vpop.permute.xlu0 %673
        %v675 = vperm.slane %v164, 7
        %v676 = vlaneseq
        %v677 = vshrl.u32 %v676, 7
        %679 = vset.pattern.permute.xlu0 %v677
        %680 = vperm.xlu0 %679, %v675
        %v681 = vpop.permute.xlu0 %680
        %v682 = vlaneseq
        %v683 = vshrl.u32 %v682, 7
        %v684 = vadd.s32 %v683, 8
        %685 = vset.pattern.permute.xlu0 %v684
        %686 = vperm.xlu0 %685, %v675
        %v687 = vpop.permute.xlu0 %686
        %v688 = vperm.slane %v165, 0
        %v689 = vlaneseq
        %v690 = vshrl.u32 %v689, 7
        %692 = vset.pattern.permute.xlu0 %v690
        %693 = vperm.xlu0 %692, %v688
        %v694 = vpop.permute.xlu0 %693
        %v695 = vlaneseq
        %v696 = vshrl.u32 %v695, 7
        %v697 = vadd.s32 %v696, 8
        %698 = vset.pattern.permute.xlu0 %v697
        %699 = vperm.xlu0 %698, %v688
        %v700 = vpop.permute.xlu0 %699
        %v701 = vperm.slane %v165, 1
        %v702 = vlaneseq
        %v703 = vshrl.u32 %v702, 7
        %705 = vset.pattern.permute.xlu0 %v703
        %706 = vperm.xlu0 %705, %v701
        %v707 = vpop.permute.xlu0 %706
        %v708 = vlaneseq
        %v709 = vshrl.u32 %v708, 7
        %v710 = vadd.s32 %v709, 8
        %711 = vset.pattern.permute.xlu0 %v710
        %712 = vperm.xlu0 %711, %v701
        %v713 = vpop.permute.xlu0 %712
        %v714 = vperm.slane %v165, 2
        %v715 = vlaneseq
        %v716 = vshrl.u32 %v715, 7
        %718 = vset.pattern.permute.xlu0 %v716
        %719 = vperm.xlu0 %718, %v714
        %v720 = vpop.permute.xlu0 %719
        %v721 = vlaneseq
        %v722 = vshrl.u32 %v721, 7
        %v723 = vadd.s32 %v722, 8
        %724 = vset.pattern.permute.xlu0 %v723
        %725 = vperm.xlu0 %724, %v714
        %v726 = vpop.permute.xlu0 %725
        %v727 = vperm.slane %v165, 3
        %v728 = vlaneseq
        %v729 = vshrl.u32 %v728, 7
        %731 = vset.pattern.permute.xlu0 %v729
        %732 = vperm.xlu0 %731, %v727
        %v733 = vpop.permute.xlu0 %732
        %v734 = vlaneseq
        %v735 = vshrl.u32 %v734, 7
        %v736 = vadd.s32 %v735, 8
        %737 = vset.pattern.permute.xlu0 %v736
        %738 = vperm.xlu0 %737, %v727
        %v739 = vpop.permute.xlu0 %738
        %v740 = vperm.slane %v165, 4
        %v741 = vlaneseq
        %v742 = vshrl.u32 %v741, 7
        %744 = vset.pattern.permute.xlu0 %v742
        %745 = vperm.xlu0 %744, %v740
        %v746 = vpop.permute.xlu0 %745
        %v747 = vlaneseq
        %v748 = vshrl.u32 %v747, 7
        %v749 = vadd.s32 %v748, 8
        %750 = vset.pattern.permute.xlu0 %v749
        %751 = vperm.xlu0 %750, %v740
        %v752 = vpop.permute.xlu0 %751
        %v753 = vperm.slane %v165, 5
        %v754 = vlaneseq
        %v755 = vshrl.u32 %v754, 7
        %757 = vset.pattern.permute.xlu0 %v755
        %758 = vperm.xlu0 %757, %v753
        %v759 = vpop.permute.xlu0 %758
        %v760 = vlaneseq
        %v761 = vshrl.u32 %v760, 7
        %v762 = vadd.s32 %v761, 8
        %763 = vset.pattern.permute.xlu0 %v762
        %764 = vperm.xlu0 %763, %v753
        %v765 = vpop.permute.xlu0 %764
        %v766 = vperm.slane %v165, 6
        %v767 = vlaneseq
        %v768 = vshrl.u32 %v767, 7
        %770 = vset.pattern.permute.xlu0 %v768
        %771 = vperm.xlu0 %770, %v766
        %v772 = vpop.permute.xlu0 %771
        %v773 = vlaneseq
        %v774 = vshrl.u32 %v773, 7
        %v775 = vadd.s32 %v774, 8
        %776 = vset.pattern.permute.xlu0 %v775
        %777 = vperm.xlu0 %776, %v766
        %v778 = vpop.permute.xlu0 %777
        %v779 = vperm.slane %v165, 7
        %v780 = vlaneseq
        %v781 = vshrl.u32 %v780, 7
        %783 = vset.pattern.permute.xlu0 %v781
        %784 = vperm.xlu0 %783, %v779
        %v785 = vpop.permute.xlu0 %784
        %v786 = vlaneseq
        %v787 = vshrl.u32 %v786, 7
        %v788 = vadd.s32 %v787, 8
        %789 = vset.pattern.permute.xlu0 %v788
        %790 = vperm.xlu0 %789, %v779
        %v791 = vpop.permute.xlu0 %790
        %v792 = vperm.slane %v166, 0
        %v793 = vlaneseq
        %v794 = vshrl.u32 %v793, 7
        %796 = vset.pattern.permute.xlu0 %v794
        %797 = vperm.xlu0 %796, %v792
        %v798 = vpop.permute.xlu0 %797
        %v799 = vlaneseq
        %v800 = vshrl.u32 %v799, 7
        %v801 = vadd.s32 %v800, 8
        %802 = vset.pattern.permute.xlu0 %v801
        %803 = vperm.xlu0 %802, %v792
        %v804 = vpop.permute.xlu0 %803
        %v805 = vperm.slane %v166, 1
        %v806 = vlaneseq
        %v807 = vshrl.u32 %v806, 7
        %809 = vset.pattern.permute.xlu0 %v807
        %810 = vperm.xlu0 %809, %v805
        %v811 = vpop.permute.xlu0 %810
        %v812 = vlaneseq
        %v813 = vshrl.u32 %v812, 7
        %v814 = vadd.s32 %v813, 8
        %815 = vset.pattern.permute.xlu0 %v814
        %816 = vperm.xlu0 %815, %v805
        %v817 = vpop.permute.xlu0 %816
        %v818 = vperm.slane %v166, 2
        %v819 = vlaneseq
        %v820 = vshrl.u32 %v819, 7
        %822 = vset.pattern.permute.xlu0 %v820
        %823 = vperm.xlu0 %822, %v818
        %v824 = vpop.permute.xlu0 %823
        %v825 = vlaneseq
        %v826 = vshrl.u32 %v825, 7
        %v827 = vadd.s32 %v826, 8
        %828 = vset.pattern.permute.xlu0 %v827
        %829 = vperm.xlu0 %828, %v818
        %v830 = vpop.permute.xlu0 %829
        %v831 = vperm.slane %v166, 3
        %v832 = vlaneseq
        %v833 = vshrl.u32 %v832, 7
        %835 = vset.pattern.permute.xlu0 %v833
        %836 = vperm.xlu0 %835, %v831
        %v837 = vpop.permute.xlu0 %836
        %v838 = vlaneseq
        %v839 = vshrl.u32 %v838, 7
        %v840 = vadd.s32 %v839, 8
        %841 = vset.pattern.permute.xlu0 %v840
        %842 = vperm.xlu0 %841, %v831
        %v843 = vpop.permute.xlu0 %842
        %v844 = vperm.slane %v166, 4
        %v845 = vlaneseq
        %v846 = vshrl.u32 %v845, 7
        %848 = vset.pattern.permute.xlu0 %v846
        %849 = vperm.xlu0 %848, %v844
        %v850 = vpop.permute.xlu0 %849
        %v851 = vlaneseq
        %v852 = vshrl.u32 %v851, 7
        %v853 = vadd.s32 %v852, 8
        %854 = vset.pattern.permute.xlu0 %v853
        %855 = vperm.xlu0 %854, %v844
        %v856 = vpop.permute.xlu0 %855
        %v857 = vperm.slane %v166, 5
        %v858 = vlaneseq
        %v859 = vshrl.u32 %v858, 7
        %861 = vset.pattern.permute.xlu0 %v859
        %862 = vperm.xlu0 %861, %v857
        %v863 = vpop.permute.xlu0 %862
        %v864 = vlaneseq
        %v865 = vshrl.u32 %v864, 7
        %v866 = vadd.s32 %v865, 8
        %867 = vset.pattern.permute.xlu0 %v866
        %868 = vperm.xlu0 %867, %v857
        %v869 = vpop.permute.xlu0 %868
        %v870 = vperm.slane %v166, 6
        %v871 = vlaneseq
        %v872 = vshrl.u32 %v871, 7
        %874 = vset.pattern.permute.xlu0 %v872
        %875 = vperm.xlu0 %874, %v870
        %v876 = vpop.permute.xlu0 %875
        %v877 = vlaneseq
        %v878 = vshrl.u32 %v877, 7
        %v879 = vadd.s32 %v878, 8
        %880 = vset.pattern.permute.xlu0 %v879
        %881 = vperm.xlu0 %880, %v870
        %v882 = vpop.permute.xlu0 %881
        %v883 = vperm.slane %v166, 7
        %v884 = vlaneseq
        %v885 = vshrl.u32 %v884, 7
        %887 = vset.pattern.permute.xlu0 %v885
        %888 = vperm.xlu0 %887, %v883
        %v889 = vpop.permute.xlu0 %888
        %v890 = vlaneseq
        %v891 = vshrl.u32 %v890, 7
        %v892 = vadd.s32 %v891, 8
        %893 = vset.pattern.permute.xlu0 %v892
        %894 = vperm.xlu0 %893, %v883
        %v895 = vpop.permute.xlu0 %894
        %v896 = vperm.slane %v167, 0
        %v897 = vlaneseq
        %v898 = vshrl.u32 %v897, 7
        %900 = vset.pattern.permute.xlu0 %v898
        %901 = vperm.xlu0 %900, %v896
        %v902 = vpop.permute.xlu0 %901
        %v903 = vlaneseq
        %v904 = vshrl.u32 %v903, 7
        %v905 = vadd.s32 %v904, 8
        %906 = vset.pattern.permute.xlu0 %v905
        %907 = vperm.xlu0 %906, %v896
        %v908 = vpop.permute.xlu0 %907
        %v909 = vperm.slane %v167, 1
        %v910 = vlaneseq
        %v911 = vshrl.u32 %v910, 7
        %913 = vset.pattern.permute.xlu0 %v911
        %914 = vperm.xlu0 %913, %v909
        %v915 = vpop.permute.xlu0 %914
        %v916 = vlaneseq
        %v917 = vshrl.u32 %v916, 7
        %v918 = vadd.s32 %v917, 8
        %919 = vset.pattern.permute.xlu0 %v918
        %920 = vperm.xlu0 %919, %v909
        %v921 = vpop.permute.xlu0 %920
        %v922 = vperm.slane %v167, 2
        %v923 = vlaneseq
        %v924 = vshrl.u32 %v923, 7
        %926 = vset.pattern.permute.xlu0 %v924
        %927 = vperm.xlu0 %926, %v922
        %v928 = vpop.permute.xlu0 %927
        %v929 = vlaneseq
        %v930 = vshrl.u32 %v929, 7
        %v931 = vadd.s32 %v930, 8
        %932 = vset.pattern.permute.xlu0 %v931
        %933 = vperm.xlu0 %932, %v922
        %v934 = vpop.permute.xlu0 %933
        %v935 = vperm.slane %v167, 3
        %v936 = vlaneseq
        %v937 = vshrl.u32 %v936, 7
        %939 = vset.pattern.permute.xlu0 %v937
        %940 = vperm.xlu0 %939, %v935
        %v941 = vpop.permute.xlu0 %940
        %v942 = vlaneseq
        %v943 = vshrl.u32 %v942, 7
        %v944 = vadd.s32 %v943, 8
        %945 = vset.pattern.permute.xlu0 %v944
        %946 = vperm.xlu0 %945, %v935
        %v947 = vpop.permute.xlu0 %946
        %v948 = vperm.slane %v167, 4
        %v949 = vlaneseq
        %v950 = vshrl.u32 %v949, 7
        %952 = vset.pattern.permute.xlu0 %v950
        %953 = vperm.xlu0 %952, %v948
        %v954 = vpop.permute.xlu0 %953
        %v955 = vlaneseq
        %v956 = vshrl.u32 %v955, 7
        %v957 = vadd.s32 %v956, 8
        %958 = vset.pattern.permute.xlu0 %v957
        %959 = vperm.xlu0 %958, %v948
        %v960 = vpop.permute.xlu0 %959
        %v961 = vperm.slane %v167, 5
        %v962 = vlaneseq
        %v963 = vshrl.u32 %v962, 7
        %965 = vset.pattern.permute.xlu0 %v963
        %966 = vperm.xlu0 %965, %v961
        %v967 = vpop.permute.xlu0 %966
        %v968 = vlaneseq
        %v969 = vshrl.u32 %v968, 7
        %v970 = vadd.s32 %v969, 8
        %971 = vset.pattern.permute.xlu0 %v970
        %972 = vperm.xlu0 %971, %v961
        %v973 = vpop.permute.xlu0 %972
        %v974 = vperm.slane %v167, 6
        %v975 = vlaneseq
        %v976 = vshrl.u32 %v975, 7
        %978 = vset.pattern.permute.xlu0 %v976
        %979 = vperm.xlu0 %978, %v974
        %v980 = vpop.permute.xlu0 %979
        %v981 = vlaneseq
        %v982 = vshrl.u32 %v981, 7
        %v983 = vadd.s32 %v982, 8
        %984 = vset.pattern.permute.xlu0 %v983
        %985 = vperm.xlu0 %984, %v974
        %v986 = vpop.permute.xlu0 %985
        %v987 = vperm.slane %v167, 7
        %v988 = vlaneseq
        %v989 = vshrl.u32 %v988, 7
        %991 = vset.pattern.permute.xlu0 %v989
        %992 = vperm.xlu0 %991, %v987
        %v993 = vpop.permute.xlu0 %992
        %v994 = vlaneseq
        %v995 = vshrl.u32 %v994, 7
        %v996 = vadd.s32 %v995, 8
        %997 = vset.pattern.permute.xlu0 %v996
        %998 = vperm.xlu0 %997, %v987
        %v999 = vpop.permute.xlu0 %998
        %v1000 = vrot.slane %v200, 4
        %vm1001 = vcmask 1047556
        %v1002 = vsel %vm1001, %v1000, %v174
        %v1003 = vrot.slane %v174, 4
        %v1004 = vsel %vm1001, %v200, %v1003
        %v1006 = vunpack.c.l.s4 1983009808
        %v1007 = vunpack.c.0.s8 %v1006
        %v1008 = vperm.slane %v1002, %v1007
        %v1010 = vunpack.c.l.s4 1983009808
        %v1011 = vunpack.c.0.s8 %v1010
        %v1012 = vperm.slane %v1004, %v1011
        %v1013 = vrot.slane %v213, 4
        %v1014 = vsel %vm1001, %v1013, %v187
        %v1015 = vrot.slane %v187, 4
        %v1016 = vsel %vm1001, %v213, %v1015
        %v1018 = vunpack.c.l.s4 1983009808
        %v1019 = vunpack.c.0.s8 %v1018
        %v1020 = vperm.slane %v1014, %v1019
        %v1022 = vunpack.c.l.s4 1983009808
        %v1023 = vunpack.c.0.s8 %v1022
        %v1024 = vperm.slane %v1016, %v1023
        %v1025 = vrot.slane %v252, 4
        %v1026 = vsel %vm1001, %v1025, %v226
        %v1027 = vrot.slane %v226, 4
        %v1028 = vsel %vm1001, %v252, %v1027
        %v1030 = vunpack.c.l.s4 1983009808
        %v1031 = vunpack.c.0.s8 %v1030
        %v1032 = vperm.slane %v1026, %v1031
        %v1034 = vunpack.c.l.s4 1983009808
        %v1035 = vunpack.c.0.s8 %v1034
        %v1036 = vperm.slane %v1028, %v1035
        %v1037 = vrot.slane %v265, 4
        %v1038 = vsel %vm1001, %v1037, %v239
        %v1039 = vrot.slane %v239, 4
        %v1040 = vsel %vm1001, %v265, %v1039
        %v1042 = vunpack.c.l.s4 1983009808
        %v1043 = vunpack.c.0.s8 %v1042
        %v1044 = vperm.slane %v1038, %v1043
        %v1046 = vunpack.c.l.s4 1983009808
        %v1047 = vunpack.c.0.s8 %v1046
        %v1048 = vperm.slane %v1040, %v1047
        %v1049 = vrot.slane %v1020, 4
        %v1050 = vsel %vm1001, %v1049, %v1008
        %v1051 = vrot.slane %v1008, 4
        %v1052 = vsel %vm1001, %v1020, %v1051
        %v1054 = vunpack.c.l.s4 1934713408
        %v1055 = vunpack.c.0.s8 %v1054
        %v1056 = vperm.slane %v1050, %v1055
        %v1058 = vunpack.c.l.s4 1934713408
        %v1059 = vunpack.c.0.s8 %v1058
        %v1060 = vperm.slane %v1052, %v1059
        %v1061 = vrot.slane %v1024, 4
        %v1062 = vsel %vm1001, %v1061, %v1012
        %v1063 = vrot.slane %v1012, 4
        %v1064 = vsel %vm1001, %v1024, %v1063
        %v1066 = vunpack.c.l.s4 1934713408
        %v1067 = vunpack.c.0.s8 %v1066
        %v1068 = vperm.slane %v1062, %v1067
        %v1070 = vunpack.c.l.s4 1934713408
        %v1071 = vunpack.c.0.s8 %v1070
        %v1072 = vperm.slane %v1064, %v1071
        %v1073 = vrot.slane %v1044, 4
        %v1074 = vsel %vm1001, %v1073, %v1032
        %v1075 = vrot.slane %v1032, 4
        %v1076 = vsel %vm1001, %v1044, %v1075
        %v1078 = vunpack.c.l.s4 1934713408
        %v1079 = vunpack.c.0.s8 %v1078
        %v1080 = vperm.slane %v1074, %v1079
        %v1082 = vunpack.c.l.s4 1934713408
        %v1083 = vunpack.c.0.s8 %v1082
        %v1084 = vperm.slane %v1076, %v1083
        %v1085 = vrot.slane %v1048, 4
        %v1086 = vsel %vm1001, %v1085, %v1036
        %v1087 = vrot.slane %v1036, 4
        %v1088 = vsel %vm1001, %v1048, %v1087
        %v1090 = vunpack.c.l.s4 1934713408
        %v1091 = vunpack.c.0.s8 %v1090
        %v1092 = vperm.slane %v1086, %v1091
        %v1094 = vunpack.c.l.s4 1934713408
        %v1095 = vunpack.c.0.s8 %v1094
        %v1096 = vperm.slane %v1088, %v1095
        %v1097 = vrot.slane %v1080, 4
        %v1098 = vsel %vm1001, %v1097, %v1056
        %v1099 = vrot.slane %v1056, 4
        %v1100 = vsel %vm1001, %v1080, %v1099
        %v1101 = vrot.slane %v1084, 4
        %v1102 = vsel %vm1001, %v1101, %v1060
        %v1103 = vrot.slane %v1060, 4
        %v1104 = vsel %vm1001, %v1084, %v1103
        %v1105 = vrot.slane %v1092, 4
        %v1106 = vsel %vm1001, %v1105, %v1068
        %v1107 = vrot.slane %v1068, 4
        %v1108 = vsel %vm1001, %v1092, %v1107
        %v1109 = vrot.slane %v1096, 4
        %v1110 = vsel %vm1001, %v1109, %v1072
        %v1111 = vrot.slane %v1072, 4
        %v1112 = vsel %vm1001, %v1096, %v1111
        %v1113 = vrot.slane %v304, 4
        %v1114 = vsel %vm1001, %v1113, %v278
        %v1115 = vrot.slane %v278, 4
        %v1116 = vsel %vm1001, %v304, %v1115
        %v1118 = vunpack.c.l.s4 1983009808
        %v1119 = vunpack.c.0.s8 %v1118
        %v1120 = vperm.slane %v1114, %v1119
        %v1122 = vunpack.c.l.s4 1983009808
        %v1123 = vunpack.c.0.s8 %v1122
        %v1124 = vperm.slane %v1116, %v1123
        %v1125 = vrot.slane %v317, 4
        %v1126 = vsel %vm1001, %v1125, %v291
        %v1127 = vrot.slane %v291, 4
        %v1128 = vsel %vm1001, %v317, %v1127
        %v1130 = vunpack.c.l.s4 1983009808
        %v1131 = vunpack.c.0.s8 %v1130
        %v1132 = vperm.slane %v1126, %v1131
        %v1134 = vunpack.c.l.s4 1983009808
        %v1135 = vunpack.c.0.s8 %v1134
        %v1136 = vperm.slane %v1128, %v1135
        %v1137 = vrot.slane %v356, 4
        %v1138 = vsel %vm1001, %v1137, %v330
        %v1139 = vrot.slane %v330, 4
        %v1140 = vsel %vm1001, %v356, %v1139
        %v1142 = vunpack.c.l.s4 1983009808
        %v1143 = vunpack.c.0.s8 %v1142
        %v1144 = vperm.slane %v1138, %v1143
        %v1146 = vunpack.c.l.s4 1983009808
        %v1147 = vunpack.c.0.s8 %v1146
        %v1148 = vperm.slane %v1140, %v1147
        %v1149 = vrot.slane %v369, 4
        %v1150 = vsel %vm1001, %v1149, %v343
        %v1151 = vrot.slane %v343, 4
        %v1152 = vsel %vm1001, %v369, %v1151
        %v1154 = vunpack.c.l.s4 1983009808
        %v1155 = vunpack.c.0.s8 %v1154
        %v1156 = vperm.slane %v1150, %v1155
        %v1158 = vunpack.c.l.s4 1983009808
        %v1159 = vunpack.c.0.s8 %v1158
        %v1160 = vperm.slane %v1152, %v1159
        %v1161 = vrot.slane %v1132, 4
        %v1162 = vsel %vm1001, %v1161, %v1120
        %v1163 = vrot.slane %v1120, 4
        %v1164 = vsel %vm1001, %v1132, %v1163
        %v1166 = vunpack.c.l.s4 1934713408
        %v1167 = vunpack.c.0.s8 %v1166
        %v1168 = vperm.slane %v1162, %v1167
        %v1170 = vunpack.c.l.s4 1934713408
        %v1171 = vunpack.c.0.s8 %v1170
        %v1172 = vperm.slane %v1164, %v1171
        %v1173 = vrot.slane %v1136, 4
        %v1174 = vsel %vm1001, %v1173, %v1124
        %v1175 = vrot.slane %v1124, 4
        %v1176 = vsel %vm1001, %v1136, %v1175
        %v1178 = vunpack.c.l.s4 1934713408
        %v1179 = vunpack.c.0.s8 %v1178
        %v1180 = vperm.slane %v1174, %v1179
        %v1182 = vunpack.c.l.s4 1934713408
        %v1183 = vunpack.c.0.s8 %v1182
        %v1184 = vperm.slane %v1176, %v1183
        %v1185 = vrot.slane %v1156, 4
        %v1186 = vsel %vm1001, %v1185, %v1144
        %v1187 = vrot.slane %v1144, 4
        %v1188 = vsel %vm1001, %v1156, %v1187
        %v1190 = vunpack.c.l.s4 1934713408
        %v1191 = vunpack.c.0.s8 %v1190
        %v1192 = vperm.slane %v1186, %v1191
        %v1194 = vunpack.c.l.s4 1934713408
        %v1195 = vunpack.c.0.s8 %v1194
        %v1196 = vperm.slane %v1188, %v1195
        %v1197 = vrot.slane %v1160, 4
        %v1198 = vsel %vm1001, %v1197, %v1148
        %v1199 = vrot.slane %v1148, 4
        %v1200 = vsel %vm1001, %v1160, %v1199
        %v1202 = vunpack.c.l.s4 1934713408
        %v1203 = vunpack.c.0.s8 %v1202
        %v1204 = vperm.slane %v1198, %v1203
        %v1206 = vunpack.c.l.s4 1934713408
        %v1207 = vunpack.c.0.s8 %v1206
        %v1208 = vperm.slane %v1200, %v1207
        %v1209 = vrot.slane %v1192, 4
        %v1210 = vsel %vm1001, %v1209, %v1168
        %v1211 = vrot.slane %v1168, 4
        %v1212 = vsel %vm1001, %v1192, %v1211
        %v1213 = vrot.slane %v1196, 4
        %v1214 = vsel %vm1001, %v1213, %v1172
        %v1215 = vrot.slane %v1172, 4
        %v1216 = vsel %vm1001, %v1196, %v1215
        %v1217 = vrot.slane %v1204, 4
        %v1218 = vsel %vm1001, %v1217, %v1180
        %v1219 = vrot.slane %v1180, 4
        %v1220 = vsel %vm1001, %v1204, %v1219
        %v1221 = vrot.slane %v1208, 4
        %v1222 = vsel %vm1001, %v1221, %v1184
        %v1223 = vrot.slane %v1184, 4
        %v1224 = vsel %vm1001, %v1208, %v1223
        %v1225 = vrot.slane %v206, 4
        %v1226 = vsel %vm1001, %v1225, %v180
        %v1227 = vrot.slane %v180, 4
        %v1228 = vsel %vm1001, %v206, %v1227
        %v1230 = vunpack.c.l.s4 1983009808
        %v1231 = vunpack.c.0.s8 %v1230
        %v1232 = vperm.slane %v1226, %v1231
        %v1234 = vunpack.c.l.s4 1983009808
        %v1235 = vunpack.c.0.s8 %v1234
        %v1236 = vperm.slane %v1228, %v1235
        %v1237 = vrot.slane %v219, 4
        %v1238 = vsel %vm1001, %v1237, %v193
        %v1239 = vrot.slane %v193, 4
        %v1240 = vsel %vm1001, %v219, %v1239
        %v1242 = vunpack.c.l.s4 1983009808
        %v1243 = vunpack.c.0.s8 %v1242
        %v1244 = vperm.slane %v1238, %v1243
        %v1246 = vunpack.c.l.s4 1983009808
        %v1247 = vunpack.c.0.s8 %v1246
        %v1248 = vperm.slane %v1240, %v1247
        %v1249 = vrot.slane %v258, 4
        %v1250 = vsel %vm1001, %v1249, %v232
        %v1251 = vrot.slane %v232, 4
        %v1252 = vsel %vm1001, %v258, %v1251
        %v1254 = vunpack.c.l.s4 1983009808
        %v1255 = vunpack.c.0.s8 %v1254
        %v1256 = vperm.slane %v1250, %v1255
        %v1258 = vunpack.c.l.s4 1983009808
        %v1259 = vunpack.c.0.s8 %v1258
        %v1260 = vperm.slane %v1252, %v1259
        %v1261 = vrot.slane %v271, 4
        %v1262 = vsel %vm1001, %v1261, %v245
        %v1263 = vrot.slane %v245, 4
        %v1264 = vsel %vm1001, %v271, %v1263
        %v1266 = vunpack.c.l.s4 1983009808
        %v1267 = vunpack.c.0.s8 %v1266
        %v1268 = vperm.slane %v1262, %v1267
        %v1270 = vunpack.c.l.s4 1983009808
        %v1271 = vunpack.c.0.s8 %v1270
        %v1272 = vperm.slane %v1264, %v1271
        %v1273 = vrot.slane %v1244, 4
        %v1274 = vsel %vm1001, %v1273, %v1232
        %v1275 = vrot.slane %v1232, 4
        %v1276 = vsel %vm1001, %v1244, %v1275
        %v1278 = vunpack.c.l.s4 1934713408
        %v1279 = vunpack.c.0.s8 %v1278
        %v1280 = vperm.slane %v1274, %v1279
        %v1282 = vunpack.c.l.s4 1934713408
        %v1283 = vunpack.c.0.s8 %v1282
        %v1284 = vperm.slane %v1276, %v1283
        %v1285 = vrot.slane %v1248, 4
        %v1286 = vsel %vm1001, %v1285, %v1236
        %v1287 = vrot.slane %v1236, 4
        %v1288 = vsel %vm1001, %v1248, %v1287
        %v1290 = vunpack.c.l.s4 1934713408
        %v1291 = vunpack.c.0.s8 %v1290
        %v1292 = vperm.slane %v1286, %v1291
        %v1294 = vunpack.c.l.s4 1934713408
        %v1295 = vunpack.c.0.s8 %v1294
        %v1296 = vperm.slane %v1288, %v1295
        %v1297 = vrot.slane %v1268, 4
        %v1298 = vsel %vm1001, %v1297, %v1256
        %v1299 = vrot.slane %v1256, 4
        %v1300 = vsel %vm1001, %v1268, %v1299
        %v1302 = vunpack.c.l.s4 1934713408
        %v1303 = vunpack.c.0.s8 %v1302
        %v1304 = vperm.slane %v1298, %v1303
        %v1306 = vunpack.c.l.s4 1934713408
        %v1307 = vunpack.c.0.s8 %v1306
        %v1308 = vperm.slane %v1300, %v1307
        %v1309 = vrot.slane %v1272, 4
        %v1310 = vsel %vm1001, %v1309, %v1260
        %v1311 = vrot.slane %v1260, 4
        %v1312 = vsel %vm1001, %v1272, %v1311
        %v1314 = vunpack.c.l.s4 1934713408
        %v1315 = vunpack.c.0.s8 %v1314
        %v1316 = vperm.slane %v1310, %v1315
        %v1318 = vunpack.c.l.s4 1934713408
        %v1319 = vunpack.c.0.s8 %v1318
        %v1320 = vperm.slane %v1312, %v1319
        %v1321 = vrot.slane %v1304, 4
        %v1322 = vsel %vm1001, %v1321, %v1280
        %v1323 = vrot.slane %v1280, 4
        %v1324 = vsel %vm1001, %v1304, %v1323
        %v1325 = vrot.slane %v1308, 4
        %v1326 = vsel %vm1001, %v1325, %v1284
        %v1327 = vrot.slane %v1284, 4
        %v1328 = vsel %vm1001, %v1308, %v1327
        %v1329 = vrot.slane %v1316, 4
        %v1330 = vsel %vm1001, %v1329, %v1292
        %v1331 = vrot.slane %v1292, 4
        %v1332 = vsel %vm1001, %v1316, %v1331
        %v1333 = vrot.slane %v1320, 4
        %v1334 = vsel %vm1001, %v1333, %v1296
        %v1335 = vrot.slane %v1296, 4
        %v1336 = vsel %vm1001, %v1320, %v1335
        %v1337 = vrot.slane %v310, 4
        %v1338 = vsel %vm1001, %v1337, %v284
        %v1339 = vrot.slane %v284, 4
        %v1340 = vsel %vm1001, %v310, %v1339
        %v1342 = vunpack.c.l.s4 1983009808
        %v1343 = vunpack.c.0.s8 %v1342
        %v1344 = vperm.slane %v1338, %v1343
        %v1346 = vunpack.c.l.s4 1983009808
        %v1347 = vunpack.c.0.s8 %v1346
        %v1348 = vperm.slane %v1340, %v1347
        %v1349 = vrot.slane %v323, 4
        %v1350 = vsel %vm1001, %v1349, %v297
        %v1351 = vrot.slane %v297, 4
        %v1352 = vsel %vm1001, %v323, %v1351
        %v1354 = vunpack.c.l.s4 1983009808
        %v1355 = vunpack.c.0.s8 %v1354
        %v1356 = vperm.slane %v1350, %v1355
        %v1358 = vunpack.c.l.s4 1983009808
        %v1359 = vunpack.c.0.s8 %v1358
        %v1360 = vperm.slane %v1352, %v1359
        %v1361 = vrot.slane %v362, 4
        %v1362 = vsel %vm1001, %v1361, %v336
        %v1363 = vrot.slane %v336, 4
        %v1364 = vsel %vm1001, %v362, %v1363
        %v1366 = vunpack.c.l.s4 1983009808
        %v1367 = vunpack.c.0.s8 %v1366
        %v1368 = vperm.slane %v1362, %v1367
        %v1370 = vunpack.c.l.s4 1983009808
        %v1371 = vunpack.c.0.s8 %v1370
        %v1372 = vperm.slane %v1364, %v1371
        %v1373 = vrot.slane %v375, 4
        %v1374 = vsel %vm1001, %v1373, %v349
        %v1375 = vrot.slane %v349, 4
        %v1376 = vsel %vm1001, %v375, %v1375
        %v1378 = vunpack.c.l.s4 1983009808
        %v1379 = vunpack.c.0.s8 %v1378
        %v1380 = vperm.slane %v1374, %v1379
        %v1382 = vunpack.c.l.s4 1983009808
        %v1383 = vunpack.c.0.s8 %v1382
        %v1384 = vperm.slane %v1376, %v1383
        %v1385 = vrot.slane %v1356, 4
        %v1386 = vsel %vm1001, %v1385, %v1344
        %v1387 = vrot.slane %v1344, 4
        %v1388 = vsel %vm1001, %v1356, %v1387
        %v1390 = vunpack.c.l.s4 1934713408
        %v1391 = vunpack.c.0.s8 %v1390
        %v1392 = vperm.slane %v1386, %v1391
        %v1394 = vunpack.c.l.s4 1934713408
        %v1395 = vunpack.c.0.s8 %v1394
        %v1396 = vperm.slane %v1388, %v1395
        %v1397 = vrot.slane %v1360, 4
        %v1398 = vsel %vm1001, %v1397, %v1348
        %v1399 = vrot.slane %v1348, 4
        %v1400 = vsel %vm1001, %v1360, %v1399
        %v1402 = vunpack.c.l.s4 1934713408
        %v1403 = vunpack.c.0.s8 %v1402
        %v1404 = vperm.slane %v1398, %v1403
        %v1406 = vunpack.c.l.s4 1934713408
        %v1407 = vunpack.c.0.s8 %v1406
        %v1408 = vperm.slane %v1400, %v1407
        %v1409 = vrot.slane %v1380, 4
        %v1410 = vsel %vm1001, %v1409, %v1368
        %v1411 = vrot.slane %v1368, 4
        %v1412 = vsel %vm1001, %v1380, %v1411
        %v1414 = vunpack.c.l.s4 1934713408
        %v1415 = vunpack.c.0.s8 %v1414
        %v1416 = vperm.slane %v1410, %v1415
        %v1418 = vunpack.c.l.s4 1934713408
        %v1419 = vunpack.c.0.s8 %v1418
        %v1420 = vperm.slane %v1412, %v1419
        %v1421 = vrot.slane %v1384, 4
        %v1422 = vsel %vm1001, %v1421, %v1372
        %v1423 = vrot.slane %v1372, 4
        %v1424 = vsel %vm1001, %v1384, %v1423
        %v1426 = vunpack.c.l.s4 1934713408
        %v1427 = vunpack.c.0.s8 %v1426
        %v1428 = vperm.slane %v1422, %v1427
        %v1430 = vunpack.c.l.s4 1934713408
        %v1431 = vunpack.c.0.s8 %v1430
        %v1432 = vperm.slane %v1424, %v1431
        %v1433 = vrot.slane %v1416, 4
        %v1434 = vsel %vm1001, %v1433, %v1392
        %v1435 = vrot.slane %v1392, 4
        %v1436 = vsel %vm1001, %v1416, %v1435
        %v1437 = vrot.slane %v1420, 4
        %v1438 = vsel %vm1001, %v1437, %v1396
        %v1439 = vrot.slane %v1396, 4
        %v1440 = vsel %vm1001, %v1420, %v1439
        %v1441 = vrot.slane %v1428, 4
        %v1442 = vsel %vm1001, %v1441, %v1404
        %v1443 = vrot.slane %v1404, 4
        %v1444 = vsel %vm1001, %v1428, %v1443
        %v1445 = vrot.slane %v1432, 4
        %v1446 = vsel %vm1001, %v1445, %v1408
        %v1447 = vrot.slane %v1408, 4
        %v1448 = vsel %vm1001, %v1432, %v1447
        %v1449 = vrot.slane %v408, 4
        %v1450 = vsel %vm1001, %v1449, %v382
        %v1451 = vrot.slane %v382, 4
        %v1452 = vsel %vm1001, %v408, %v1451
        %v1454 = vunpack.c.l.s4 1983009808
        %v1455 = vunpack.c.0.s8 %v1454
        %v1456 = vperm.slane %v1450, %v1455
        %v1458 = vunpack.c.l.s4 1983009808
        %v1459 = vunpack.c.0.s8 %v1458
        %v1460 = vperm.slane %v1452, %v1459
        %v1461 = vrot.slane %v421, 4
        %v1462 = vsel %vm1001, %v1461, %v395
        %v1463 = vrot.slane %v395, 4
        %v1464 = vsel %vm1001, %v421, %v1463
        %v1466 = vunpack.c.l.s4 1983009808
        %v1467 = vunpack.c.0.s8 %v1466
        %v1468 = vperm.slane %v1462, %v1467
        %v1470 = vunpack.c.l.s4 1983009808
        %v1471 = vunpack.c.0.s8 %v1470
        %v1472 = vperm.slane %v1464, %v1471
        %v1473 = vrot.slane %v460, 4
        %v1474 = vsel %vm1001, %v1473, %v434
        %v1475 = vrot.slane %v434, 4
        %v1476 = vsel %vm1001, %v460, %v1475
        %v1478 = vunpack.c.l.s4 1983009808
        %v1479 = vunpack.c.0.s8 %v1478
        %v1480 = vperm.slane %v1474, %v1479
        %v1482 = vunpack.c.l.s4 1983009808
        %v1483 = vunpack.c.0.s8 %v1482
        %v1484 = vperm.slane %v1476, %v1483
        %v1485 = vrot.slane %v473, 4
        %v1486 = vsel %vm1001, %v1485, %v447
        %v1487 = vrot.slane %v447, 4
        %v1488 = vsel %vm1001, %v473, %v1487
        %v1490 = vunpack.c.l.s4 1983009808
        %v1491 = vunpack.c.0.s8 %v1490
        %v1492 = vperm.slane %v1486, %v1491
        %v1494 = vunpack.c.l.s4 1983009808
        %v1495 = vunpack.c.0.s8 %v1494
        %v1496 = vperm.slane %v1488, %v1495
        %v1497 = vrot.slane %v1468, 4
        %v1498 = vsel %vm1001, %v1497, %v1456
        %v1499 = vrot.slane %v1456, 4
        %v1500 = vsel %vm1001, %v1468, %v1499
        %v1502 = vunpack.c.l.s4 1934713408
        %v1503 = vunpack.c.0.s8 %v1502
        %v1504 = vperm.slane %v1498, %v1503
        %v1506 = vunpack.c.l.s4 1934713408
        %v1507 = vunpack.c.0.s8 %v1506
        %v1508 = vperm.slane %v1500, %v1507
        %v1509 = vrot.slane %v1472, 4
        %v1510 = vsel %vm1001, %v1509, %v1460
        %v1511 = vrot.slane %v1460, 4
        %v1512 = vsel %vm1001, %v1472, %v1511
        %v1514 = vunpack.c.l.s4 1934713408
        %v1515 = vunpack.c.0.s8 %v1514
        %v1516 = vperm.slane %v1510, %v1515
        %v1518 = vunpack.c.l.s4 1934713408
        %v1519 = vunpack.c.0.s8 %v1518
        %v1520 = vperm.slane %v1512, %v1519
        %v1521 = vrot.slane %v1492, 4
        %v1522 = vsel %vm1001, %v1521, %v1480
        %v1523 = vrot.slane %v1480, 4
        %v1524 = vsel %vm1001, %v1492, %v1523
        %v1526 = vunpack.c.l.s4 1934713408
        %v1527 = vunpack.c.0.s8 %v1526
        %v1528 = vperm.slane %v1522, %v1527
        %v1530 = vunpack.c.l.s4 1934713408
        %v1531 = vunpack.c.0.s8 %v1530
        %v1532 = vperm.slane %v1524, %v1531
        %v1533 = vrot.slane %v1496, 4
        %v1534 = vsel %vm1001, %v1533, %v1484
        %v1535 = vrot.slane %v1484, 4
        %v1536 = vsel %vm1001, %v1496, %v1535
        %v1538 = vunpack.c.l.s4 1934713408
        %v1539 = vunpack.c.0.s8 %v1538
        %v1540 = vperm.slane %v1534, %v1539
        %v1542 = vunpack.c.l.s4 1934713408
        %v1543 = vunpack.c.0.s8 %v1542
        %v1544 = vperm.slane %v1536, %v1543
        %v1545 = vrot.slane %v1528, 4
        %v1546 = vsel %vm1001, %v1545, %v1504
        %v1547 = vrot.slane %v1504, 4
        %v1548 = vsel %vm1001, %v1528, %v1547
        %v1549 = vrot.slane %v1532, 4
        %v1550 = vsel %vm1001, %v1549, %v1508
        %v1551 = vrot.slane %v1508, 4
        %v1552 = vsel %vm1001, %v1532, %v1551
        %v1553 = vrot.slane %v1540, 4
        %v1554 = vsel %vm1001, %v1553, %v1516
        %v1555 = vrot.slane %v1516, 4
        %v1556 = vsel %vm1001, %v1540, %v1555
        %v1557 = vrot.slane %v1544, 4
        %v1558 = vsel %vm1001, %v1557, %v1520
        %v1559 = vrot.slane %v1520, 4
        %v1560 = vsel %vm1001, %v1544, %v1559
        %v1561 = vrot.slane %v512, 4
        %v1562 = vsel %vm1001, %v1561, %v486
        %v1563 = vrot.slane %v486, 4
        %v1564 = vsel %vm1001, %v512, %v1563
        %v1566 = vunpack.c.l.s4 1983009808
        %v1567 = vunpack.c.0.s8 %v1566
        %v1568 = vperm.slane %v1562, %v1567
        %v1570 = vunpack.c.l.s4 1983009808
        %v1571 = vunpack.c.0.s8 %v1570
        %v1572 = vperm.slane %v1564, %v1571
        %v1573 = vrot.slane %v525, 4
        %v1574 = vsel %vm1001, %v1573, %v499
        %v1575 = vrot.slane %v499, 4
        %v1576 = vsel %vm1001, %v525, %v1575
        %v1578 = vunpack.c.l.s4 1983009808
        %v1579 = vunpack.c.0.s8 %v1578
        %v1580 = vperm.slane %v1574, %v1579
        %v1582 = vunpack.c.l.s4 1983009808
        %v1583 = vunpack.c.0.s8 %v1582
        %v1584 = vperm.slane %v1576, %v1583
        %v1585 = vrot.slane %v564, 4
        %v1586 = vsel %vm1001, %v1585, %v538
        %v1587 = vrot.slane %v538, 4
        %v1588 = vsel %vm1001, %v564, %v1587
        %v1590 = vunpack.c.l.s4 1983009808
        %v1591 = vunpack.c.0.s8 %v1590
        %v1592 = vperm.slane %v1586, %v1591
        %v1594 = vunpack.c.l.s4 1983009808
        %v1595 = vunpack.c.0.s8 %v1594
        %v1596 = vperm.slane %v1588, %v1595
        %v1597 = vrot.slane %v577, 4
        %v1598 = vsel %vm1001, %v1597, %v551
        %v1599 = vrot.slane %v551, 4
        %v1600 = vsel %vm1001, %v577, %v1599
        %v1602 = vunpack.c.l.s4 1983009808
        %v1603 = vunpack.c.0.s8 %v1602
        %v1604 = vperm.slane %v1598, %v1603
        %v1606 = vunpack.c.l.s4 1983009808
        %v1607 = vunpack.c.0.s8 %v1606
        %v1608 = vperm.slane %v1600, %v1607
        %v1609 = vrot.slane %v1580, 4
        %v1610 = vsel %vm1001, %v1609, %v1568
        %v1611 = vrot.slane %v1568, 4
        %v1612 = vsel %vm1001, %v1580, %v1611
        %v1614 = vunpack.c.l.s4 1934713408
        %v1615 = vunpack.c.0.s8 %v1614
        %v1616 = vperm.slane %v1610, %v1615
        %v1618 = vunpack.c.l.s4 1934713408
        %v1619 = vunpack.c.0.s8 %v1618
        %v1620 = vperm.slane %v1612, %v1619
        %v1621 = vrot.slane %v1584, 4
        %v1622 = vsel %vm1001, %v1621, %v1572
        %v1623 = vrot.slane %v1572, 4
        %v1624 = vsel %vm1001, %v1584, %v1623
        %v1626 = vunpack.c.l.s4 1934713408
        %v1627 = vunpack.c.0.s8 %v1626
        %v1628 = vperm.slane %v1622, %v1627
        %v1630 = vunpack.c.l.s4 1934713408
        %v1631 = vunpack.c.0.s8 %v1630
        %v1632 = vperm.slane %v1624, %v1631
        %v1633 = vrot.slane %v1604, 4
        %v1634 = vsel %vm1001, %v1633, %v1592
        %v1635 = vrot.slane %v1592, 4
        %v1636 = vsel %vm1001, %v1604, %v1635
        %v1638 = vunpack.c.l.s4 1934713408
        %v1639 = vunpack.c.0.s8 %v1638
        %v1640 = vperm.slane %v1634, %v1639
        %v1642 = vunpack.c.l.s4 1934713408
        %v1643 = vunpack.c.0.s8 %v1642
        %v1644 = vperm.slane %v1636, %v1643
        %v1645 = vrot.slane %v1608, 4
        %v1646 = vsel %vm1001, %v1645, %v1596
        %v1647 = vrot.slane %v1596, 4
        %v1648 = vsel %vm1001, %v1608, %v1647
        %v1650 = vunpack.c.l.s4 1934713408
        %v1651 = vunpack.c.0.s8 %v1650
        %v1652 = vperm.slane %v1646, %v1651
        %v1654 = vunpack.c.l.s4 1934713408
        %v1655 = vunpack.c.0.s8 %v1654
        %v1656 = vperm.slane %v1648, %v1655
        %v1657 = vrot.slane %v1640, 4
        %v1658 = vsel %vm1001, %v1657, %v1616
        %v1659 = vrot.slane %v1616, 4
        %v1660 = vsel %vm1001, %v1640, %v1659
        %v1661 = vrot.slane %v1644, 4
        %v1662 = vsel %vm1001, %v1661, %v1620
        %v1663 = vrot.slane %v1620, 4
        %v1664 = vsel %vm1001, %v1644, %v1663
        %v1665 = vrot.slane %v1652, 4
        %v1666 = vsel %vm1001, %v1665, %v1628
        %v1667 = vrot.slane %v1628, 4
        %v1668 = vsel %vm1001, %v1652, %v1667
        %v1669 = vrot.slane %v1656, 4
        %v1670 = vsel %vm1001, %v1669, %v1632
        %v1671 = vrot.slane %v1632, 4
        %v1672 = vsel %vm1001, %v1656, %v1671
        %v1673 = vrot.slane %v414, 4
        %v1674 = vsel %vm1001, %v1673, %v388
        %v1675 = vrot.slane %v388, 4
        %v1676 = vsel %vm1001, %v414, %v1675
        %v1678 = vunpack.c.l.s4 1983009808
        %v1679 = vunpack.c.0.s8 %v1678
        %v1680 = vperm.slane %v1674, %v1679
        %v1682 = vunpack.c.l.s4 1983009808
        %v1683 = vunpack.c.0.s8 %v1682
        %v1684 = vperm.slane %v1676, %v1683
        %v1685 = vrot.slane %v427, 4
        %v1686 = vsel %vm1001, %v1685, %v401
        %v1687 = vrot.slane %v401, 4
        %v1688 = vsel %vm1001, %v427, %v1687
        %v1690 = vunpack.c.l.s4 1983009808
        %v1691 = vunpack.c.0.s8 %v1690
        %v1692 = vperm.slane %v1686, %v1691
        %v1694 = vunpack.c.l.s4 1983009808
        %v1695 = vunpack.c.0.s8 %v1694
        %v1696 = vperm.slane %v1688, %v1695
        %v1697 = vrot.slane %v466, 4
        %v1698 = vsel %vm1001, %v1697, %v440
        %v1699 = vrot.slane %v440, 4
        %v1700 = vsel %vm1001, %v466, %v1699
        %v1702 = vunpack.c.l.s4 1983009808
        %v1703 = vunpack.c.0.s8 %v1702
        %v1704 = vperm.slane %v1698, %v1703
        %v1706 = vunpack.c.l.s4 1983009808
        %v1707 = vunpack.c.0.s8 %v1706
        %v1708 = vperm.slane %v1700, %v1707
        %v1709 = vrot.slane %v479, 4
        %v1710 = vsel %vm1001, %v1709, %v453
        %v1711 = vrot.slane %v453, 4
        %v1712 = vsel %vm1001, %v479, %v1711
        %v1714 = vunpack.c.l.s4 1983009808
        %v1715 = vunpack.c.0.s8 %v1714
        %v1716 = vperm.slane %v1710, %v1715
        %v1718 = vunpack.c.l.s4 1983009808
        %v1719 = vunpack.c.0.s8 %v1718
        %v1720 = vperm.slane %v1712, %v1719
        %v1721 = vrot.slane %v1692, 4
        %v1722 = vsel %vm1001, %v1721, %v1680
        %v1723 = vrot.slane %v1680, 4
        %v1724 = vsel %vm1001, %v1692, %v1723
        %v1726 = vunpack.c.l.s4 1934713408
        %v1727 = vunpack.c.0.s8 %v1726
        %v1728 = vperm.slane %v1722, %v1727
        %v1730 = vunpack.c.l.s4 1934713408
        %v1731 = vunpack.c.0.s8 %v1730
        %v1732 = vperm.slane %v1724, %v1731
        %v1733 = vrot.slane %v1696, 4
        %v1734 = vsel %vm1001, %v1733, %v1684
        %v1735 = vrot.slane %v1684, 4
        %v1736 = vsel %vm1001, %v1696, %v1735
        %v1738 = vunpack.c.l.s4 1934713408
        %v1739 = vunpack.c.0.s8 %v1738
        %v1740 = vperm.slane %v1734, %v1739
        %v1742 = vunpack.c.l.s4 1934713408
        %v1743 = vunpack.c.0.s8 %v1742
        %v1744 = vperm.slane %v1736, %v1743
        %v1745 = vrot.slane %v1716, 4
        %v1746 = vsel %vm1001, %v1745, %v1704
        %v1747 = vrot.slane %v1704, 4
        %v1748 = vsel %vm1001, %v1716, %v1747
        %v1750 = vunpack.c.l.s4 1934713408
        %v1751 = vunpack.c.0.s8 %v1750
        %v1752 = vperm.slane %v1746, %v1751
        %v1754 = vunpack.c.l.s4 1934713408
        %v1755 = vunpack.c.0.s8 %v1754
        %v1756 = vperm.slane %v1748, %v1755
        %v1757 = vrot.slane %v1720, 4
        %v1758 = vsel %vm1001, %v1757, %v1708
        %v1759 = vrot.slane %v1708, 4
        %v1760 = vsel %vm1001, %v1720, %v1759
        %v1762 = vunpack.c.l.s4 1934713408
        %v1763 = vunpack.c.0.s8 %v1762
        %v1764 = vperm.slane %v1758, %v1763
        %v1766 = vunpack.c.l.s4 1934713408
        %v1767 = vunpack.c.0.s8 %v1766
        %v1768 = vperm.slane %v1760, %v1767
        %v1769 = vrot.slane %v1752, 4
        %v1770 = vsel %vm1001, %v1769, %v1728
        %v1771 = vrot.slane %v1728, 4
        %v1772 = vsel %vm1001, %v1752, %v1771
        %v1773 = vrot.slane %v1756, 4
        %v1774 = vsel %vm1001, %v1773, %v1732
        %v1775 = vrot.slane %v1732, 4
        %v1776 = vsel %vm1001, %v1756, %v1775
        %v1777 = vrot.slane %v1764, 4
        %v1778 = vsel %vm1001, %v1777, %v1740
        %v1779 = vrot.slane %v1740, 4
        %v1780 = vsel %vm1001, %v1764, %v1779
        %v1781 = vrot.slane %v1768, 4
        %v1782 = vsel %vm1001, %v1781, %v1744
        %v1783 = vrot.slane %v1744, 4
        %v1784 = vsel %vm1001, %v1768, %v1783
        %v1785 = vrot.slane %v518, 4
        %v1786 = vsel %vm1001, %v1785, %v492
        %v1787 = vrot.slane %v492, 4
        %v1788 = vsel %vm1001, %v518, %v1787
        %v1790 = vunpack.c.l.s4 1983009808
        %v1791 = vunpack.c.0.s8 %v1790
        %v1792 = vperm.slane %v1786, %v1791
        %v1794 = vunpack.c.l.s4 1983009808
        %v1795 = vunpack.c.0.s8 %v1794
        %v1796 = vperm.slane %v1788, %v1795
        %v1797 = vrot.slane %v531, 4
        %v1798 = vsel %vm1001, %v1797, %v505
        %v1799 = vrot.slane %v505, 4
        %v1800 = vsel %vm1001, %v531, %v1799
        %v1802 = vunpack.c.l.s4 1983009808
        %v1803 = vunpack.c.0.s8 %v1802
        %v1804 = vperm.slane %v1798, %v1803
        %v1806 = vunpack.c.l.s4 1983009808
        %v1807 = vunpack.c.0.s8 %v1806
        %v1808 = vperm.slane %v1800, %v1807
        %v1809 = vrot.slane %v570, 4
        %v1810 = vsel %vm1001, %v1809, %v544
        %v1811 = vrot.slane %v544, 4
        %v1812 = vsel %vm1001, %v570, %v1811
        %v1814 = vunpack.c.l.s4 1983009808
        %v1815 = vunpack.c.0.s8 %v1814
        %v1816 = vperm.slane %v1810, %v1815
        %v1818 = vunpack.c.l.s4 1983009808
        %v1819 = vunpack.c.0.s8 %v1818
        %v1820 = vperm.slane %v1812, %v1819
        %v1821 = vrot.slane %v583, 4
        %v1822 = vsel %vm1001, %v1821, %v557
        %v1823 = vrot.slane %v557, 4
        %v1824 = vsel %vm1001, %v583, %v1823
        %v1826 = vunpack.c.l.s4 1983009808
        %v1827 = vunpack.c.0.s8 %v1826
        %v1828 = vperm.slane %v1822, %v1827
        %v1830 = vunpack.c.l.s4 1983009808
        %v1831 = vunpack.c.0.s8 %v1830
        %v1832 = vperm.slane %v1824, %v1831
        %v1833 = vrot.slane %v1804, 4
        %v1834 = vsel %vm1001, %v1833, %v1792
        %v1835 = vrot.slane %v1792, 4
        %v1836 = vsel %vm1001, %v1804, %v1835
        %v1838 = vunpack.c.l.s4 1934713408
        %v1839 = vunpack.c.0.s8 %v1838
        %v1840 = vperm.slane %v1834, %v1839
        %v1842 = vunpack.c.l.s4 1934713408
        %v1843 = vunpack.c.0.s8 %v1842
        %v1844 = vperm.slane %v1836, %v1843
        %v1845 = vrot.slane %v1808, 4
        %v1846 = vsel %vm1001, %v1845, %v1796
        %v1847 = vrot.slane %v1796, 4
        %v1848 = vsel %vm1001, %v1808, %v1847
        %v1850 = vunpack.c.l.s4 1934713408
        %v1851 = vunpack.c.0.s8 %v1850
        %v1852 = vperm.slane %v1846, %v1851
        %v1854 = vunpack.c.l.s4 1934713408
        %v1855 = vunpack.c.0.s8 %v1854
        %v1856 = vperm.slane %v1848, %v1855
        %v1857 = vrot.slane %v1828, 4
        %v1858 = vsel %vm1001, %v1857, %v1816
        %v1859 = vrot.slane %v1816, 4
        %v1860 = vsel %vm1001, %v1828, %v1859
        %v1862 = vunpack.c.l.s4 1934713408
        %v1863 = vunpack.c.0.s8 %v1862
        %v1864 = vperm.slane %v1858, %v1863
        %v1866 = vunpack.c.l.s4 1934713408
        %v1867 = vunpack.c.0.s8 %v1866
        %v1868 = vperm.slane %v1860, %v1867
        %v1869 = vrot.slane %v1832, 4
        %v1870 = vsel %vm1001, %v1869, %v1820
        %v1871 = vrot.slane %v1820, 4
        %v1872 = vsel %vm1001, %v1832, %v1871
        %v1874 = vunpack.c.l.s4 1934713408
        %v1875 = vunpack.c.0.s8 %v1874
        %v1876 = vperm.slane %v1870, %v1875
        %v1878 = vunpack.c.l.s4 1934713408
        %v1879 = vunpack.c.0.s8 %v1878
        %v1880 = vperm.slane %v1872, %v1879
        %v1881 = vrot.slane %v1864, 4
        %v1882 = vsel %vm1001, %v1881, %v1840
        %v1883 = vrot.slane %v1840, 4
        %v1884 = vsel %vm1001, %v1864, %v1883
        %v1885 = vrot.slane %v1868, 4
        %v1886 = vsel %vm1001, %v1885, %v1844
        %v1887 = vrot.slane %v1844, 4
        %v1888 = vsel %vm1001, %v1868, %v1887
        %v1889 = vrot.slane %v1876, 4
        %v1890 = vsel %vm1001, %v1889, %v1852
        %v1891 = vrot.slane %v1852, 4
        %v1892 = vsel %vm1001, %v1876, %v1891
        %v1893 = vrot.slane %v1880, 4
        %v1894 = vsel %vm1001, %v1893, %v1856
        %v1895 = vrot.slane %v1856, 4
        %v1896 = vsel %vm1001, %v1880, %v1895
        %v1897 = vrot.slane %v616, 4
        %v1898 = vsel %vm1001, %v1897, %v590
        %v1899 = vrot.slane %v590, 4
        %v1900 = vsel %vm1001, %v616, %v1899
        %v1902 = vunpack.c.l.s4 1983009808
        %v1903 = vunpack.c.0.s8 %v1902
        %v1904 = vperm.slane %v1898, %v1903
        %v1906 = vunpack.c.l.s4 1983009808
        %v1907 = vunpack.c.0.s8 %v1906
        %v1908 = vperm.slane %v1900, %v1907
        %v1909 = vrot.slane %v629, 4
        %v1910 = vsel %vm1001, %v1909, %v603
        %v1911 = vrot.slane %v603, 4
        %v1912 = vsel %vm1001, %v629, %v1911
        %v1914 = vunpack.c.l.s4 1983009808
        %v1915 = vunpack.c.0.s8 %v1914
        %v1916 = vperm.slane %v1910, %v1915
        %v1918 = vunpack.c.l.s4 1983009808
        %v1919 = vunpack.c.0.s8 %v1918
        %v1920 = vperm.slane %v1912, %v1919
        %v1921 = vrot.slane %v668, 4
        %v1922 = vsel %vm1001, %v1921, %v642
        %v1923 = vrot.slane %v642, 4
        %v1924 = vsel %vm1001, %v668, %v1923
        %v1926 = vunpack.c.l.s4 1983009808
        %v1927 = vunpack.c.0.s8 %v1926
        %v1928 = vperm.slane %v1922, %v1927
        %v1930 = vunpack.c.l.s4 1983009808
        %v1931 = vunpack.c.0.s8 %v1930
        %v1932 = vperm.slane %v1924, %v1931
        %v1933 = vrot.slane %v681, 4
        %v1934 = vsel %vm1001, %v1933, %v655
        %v1935 = vrot.slane %v655, 4
        %v1936 = vsel %vm1001, %v681, %v1935
        %v1938 = vunpack.c.l.s4 1983009808
        %v1939 = vunpack.c.0.s8 %v1938
        %v1940 = vperm.slane %v1934, %v1939
        %v1942 = vunpack.c.l.s4 1983009808
        %v1943 = vunpack.c.0.s8 %v1942
        %v1944 = vperm.slane %v1936, %v1943
        %v1945 = vrot.slane %v1916, 4
        %v1946 = vsel %vm1001, %v1945, %v1904
        %v1947 = vrot.slane %v1904, 4
        %v1948 = vsel %vm1001, %v1916, %v1947
        %v1950 = vunpack.c.l.s4 1934713408
        %v1951 = vunpack.c.0.s8 %v1950
        %v1952 = vperm.slane %v1946, %v1951
        %v1954 = vunpack.c.l.s4 1934713408
        %v1955 = vunpack.c.0.s8 %v1954
        %v1956 = vperm.slane %v1948, %v1955
        %v1957 = vrot.slane %v1920, 4
        %v1958 = vsel %vm1001, %v1957, %v1908
        %v1959 = vrot.slane %v1908, 4
        %v1960 = vsel %vm1001, %v1920, %v1959
        %v1962 = vunpack.c.l.s4 1934713408
        %v1963 = vunpack.c.0.s8 %v1962
        %v1964 = vperm.slane %v1958, %v1963
        %v1966 = vunpack.c.l.s4 1934713408
        %v1967 = vunpack.c.0.s8 %v1966
        %v1968 = vperm.slane %v1960, %v1967
        %v1969 = vrot.slane %v1940, 4
        %v1970 = vsel %vm1001, %v1969, %v1928
        %v1971 = vrot.slane %v1928, 4
        %v1972 = vsel %vm1001, %v1940, %v1971
        %v1974 = vunpack.c.l.s4 1934713408
        %v1975 = vunpack.c.0.s8 %v1974
        %v1976 = vperm.slane %v1970, %v1975
        %v1978 = vunpack.c.l.s4 1934713408
        %v1979 = vunpack.c.0.s8 %v1978
        %v1980 = vperm.slane %v1972, %v1979
        %v1981 = vrot.slane %v1944, 4
        %v1982 = vsel %vm1001, %v1981, %v1932
        %v1983 = vrot.slane %v1932, 4
        %v1984 = vsel %vm1001, %v1944, %v1983
        %v1986 = vunpack.c.l.s4 1934713408
        %v1987 = vunpack.c.0.s8 %v1986
        %v1988 = vperm.slane %v1982, %v1987
        %v1990 = vunpack.c.l.s4 1934713408
        %v1991 = vunpack.c.0.s8 %v1990
        %v1992 = vperm.slane %v1984, %v1991
        %v1993 = vrot.slane %v1976, 4
        %v1994 = vsel %vm1001, %v1993, %v1952
        %v1995 = vrot.slane %v1952, 4
        %v1996 = vsel %vm1001, %v1976, %v1995
        %v1997 = vrot.slane %v1980, 4
        %v1998 = vsel %vm1001, %v1997, %v1956
        %v1999 = vrot.slane %v1956, 4
        %v2000 = vsel %vm1001, %v1980, %v1999
        %v2001 = vrot.slane %v1988, 4
        %v2002 = vsel %vm1001, %v2001, %v1964
        %v2003 = vrot.slane %v1964, 4
        %v2004 = vsel %vm1001, %v1988, %v2003
        %v2005 = vrot.slane %v1992, 4
        %v2006 = vsel %vm1001, %v2005, %v1968
        %v2007 = vrot.slane %v1968, 4
        %v2008 = vsel %vm1001, %v1992, %v2007
        %v2009 = vrot.slane %v720, 4
        %v2010 = vsel %vm1001, %v2009, %v694
        %v2011 = vrot.slane %v694, 4
        %v2012 = vsel %vm1001, %v720, %v2011
        %v2014 = vunpack.c.l.s4 1983009808
        %v2015 = vunpack.c.0.s8 %v2014
        %v2016 = vperm.slane %v2010, %v2015
        %v2018 = vunpack.c.l.s4 1983009808
        %v2019 = vunpack.c.0.s8 %v2018
        %v2020 = vperm.slane %v2012, %v2019
        %v2021 = vrot.slane %v733, 4
        %v2022 = vsel %vm1001, %v2021, %v707
        %v2023 = vrot.slane %v707, 4
        %v2024 = vsel %vm1001, %v733, %v2023
        %v2026 = vunpack.c.l.s4 1983009808
        %v2027 = vunpack.c.0.s8 %v2026
        %v2028 = vperm.slane %v2022, %v2027
        %v2030 = vunpack.c.l.s4 1983009808
        %v2031 = vunpack.c.0.s8 %v2030
        %v2032 = vperm.slane %v2024, %v2031
        %v2033 = vrot.slane %v772, 4
        %v2034 = vsel %vm1001, %v2033, %v746
        %v2035 = vrot.slane %v746, 4
        %v2036 = vsel %vm1001, %v772, %v2035
        %v2038 = vunpack.c.l.s4 1983009808
        %v2039 = vunpack.c.0.s8 %v2038
        %v2040 = vperm.slane %v2034, %v2039
        %v2042 = vunpack.c.l.s4 1983009808
        %v2043 = vunpack.c.0.s8 %v2042
        %v2044 = vperm.slane %v2036, %v2043
        %v2045 = vrot.slane %v785, 4
        %v2046 = vsel %vm1001, %v2045, %v759
        %v2047 = vrot.slane %v759, 4
        %v2048 = vsel %vm1001, %v785, %v2047
        %v2050 = vunpack.c.l.s4 1983009808
        %v2051 = vunpack.c.0.s8 %v2050
        %v2052 = vperm.slane %v2046, %v2051
        %v2054 = vunpack.c.l.s4 1983009808
        %v2055 = vunpack.c.0.s8 %v2054
        %v2056 = vperm.slane %v2048, %v2055
        %v2057 = vrot.slane %v2028, 4
        %v2058 = vsel %vm1001, %v2057, %v2016
        %v2059 = vrot.slane %v2016, 4
        %v2060 = vsel %vm1001, %v2028, %v2059
        %v2062 = vunpack.c.l.s4 1934713408
        %v2063 = vunpack.c.0.s8 %v2062
        %v2064 = vperm.slane %v2058, %v2063
        %v2066 = vunpack.c.l.s4 1934713408
        %v2067 = vunpack.c.0.s8 %v2066
        %v2068 = vperm.slane %v2060, %v2067
        %v2069 = vrot.slane %v2032, 4
        %v2070 = vsel %vm1001, %v2069, %v2020
        %v2071 = vrot.slane %v2020, 4
        %v2072 = vsel %vm1001, %v2032, %v2071
        %v2074 = vunpack.c.l.s4 1934713408
        %v2075 = vunpack.c.0.s8 %v2074
        %v2076 = vperm.slane %v2070, %v2075
        %v2078 = vunpack.c.l.s4 1934713408
        %v2079 = vunpack.c.0.s8 %v2078
        %v2080 = vperm.slane %v2072, %v2079
        %v2081 = vrot.slane %v2052, 4
        %v2082 = vsel %vm1001, %v2081, %v2040
        %v2083 = vrot.slane %v2040, 4
        %v2084 = vsel %vm1001, %v2052, %v2083
        %v2086 = vunpack.c.l.s4 1934713408
        %v2087 = vunpack.c.0.s8 %v2086
        %v2088 = vperm.slane %v2082, %v2087
        %v2090 = vunpack.c.l.s4 1934713408
        %v2091 = vunpack.c.0.s8 %v2090
        %v2092 = vperm.slane %v2084, %v2091
        %v2093 = vrot.slane %v2056, 4
        %v2094 = vsel %vm1001, %v2093, %v2044
        %v2095 = vrot.slane %v2044, 4
        %v2096 = vsel %vm1001, %v2056, %v2095
        %v2098 = vunpack.c.l.s4 1934713408
        %v2099 = vunpack.c.0.s8 %v2098
        %v2100 = vperm.slane %v2094, %v2099
        %v2102 = vunpack.c.l.s4 1934713408
        %v2103 = vunpack.c.0.s8 %v2102
        %v2104 = vperm.slane %v2096, %v2103
        %v2105 = vrot.slane %v2088, 4
        %v2106 = vsel %vm1001, %v2105, %v2064
        %v2107 = vrot.slane %v2064, 4
        %v2108 = vsel %vm1001, %v2088, %v2107
        %v2109 = vrot.slane %v2092, 4
        %v2110 = vsel %vm1001, %v2109, %v2068
        %v2111 = vrot.slane %v2068, 4
        %v2112 = vsel %vm1001, %v2092, %v2111
        %v2113 = vrot.slane %v2100, 4
        %v2114 = vsel %vm1001, %v2113, %v2076
        %v2115 = vrot.slane %v2076, 4
        %v2116 = vsel %vm1001, %v2100, %v2115
        %v2117 = vrot.slane %v2104, 4
        %v2118 = vsel %vm1001, %v2117, %v2080
        %v2119 = vrot.slane %v2080, 4
        %v2120 = vsel %vm1001, %v2104, %v2119
        %v2121 = vrot.slane %v622, 4
        %v2122 = vsel %vm1001, %v2121, %v596
        %v2123 = vrot.slane %v596, 4
        %v2124 = vsel %vm1001, %v622, %v2123
        %v2126 = vunpack.c.l.s4 1983009808
        %v2127 = vunpack.c.0.s8 %v2126
        %v2128 = vperm.slane %v2122, %v2127
        %v2130 = vunpack.c.l.s4 1983009808
        %v2131 = vunpack.c.0.s8 %v2130
        %v2132 = vperm.slane %v2124, %v2131
        %v2133 = vrot.slane %v635, 4
        %v2134 = vsel %vm1001, %v2133, %v609
        %v2135 = vrot.slane %v609, 4
        %v2136 = vsel %vm1001, %v635, %v2135
        %v2138 = vunpack.c.l.s4 1983009808
        %v2139 = vunpack.c.0.s8 %v2138
        %v2140 = vperm.slane %v2134, %v2139
        %v2142 = vunpack.c.l.s4 1983009808
        %v2143 = vunpack.c.0.s8 %v2142
        %v2144 = vperm.slane %v2136, %v2143
        %v2145 = vrot.slane %v674, 4
        %v2146 = vsel %vm1001, %v2145, %v648
        %v2147 = vrot.slane %v648, 4
        %v2148 = vsel %vm1001, %v674, %v2147
        %v2150 = vunpack.c.l.s4 1983009808
        %v2151 = vunpack.c.0.s8 %v2150
        %v2152 = vperm.slane %v2146, %v2151
        %v2154 = vunpack.c.l.s4 1983009808
        %v2155 = vunpack.c.0.s8 %v2154
        %v2156 = vperm.slane %v2148, %v2155
        %v2157 = vrot.slane %v687, 4
        %v2158 = vsel %vm1001, %v2157, %v661
        %v2159 = vrot.slane %v661, 4
        %v2160 = vsel %vm1001, %v687, %v2159
        %v2162 = vunpack.c.l.s4 1983009808
        %v2163 = vunpack.c.0.s8 %v2162
        %v2164 = vperm.slane %v2158, %v2163
        %v2166 = vunpack.c.l.s4 1983009808
        %v2167 = vunpack.c.0.s8 %v2166
        %v2168 = vperm.slane %v2160, %v2167
        %v2169 = vrot.slane %v2140, 4
        %v2170 = vsel %vm1001, %v2169, %v2128
        %v2171 = vrot.slane %v2128, 4
        %v2172 = vsel %vm1001, %v2140, %v2171
        %v2174 = vunpack.c.l.s4 1934713408
        %v2175 = vunpack.c.0.s8 %v2174
        %v2176 = vperm.slane %v2170, %v2175
        %v2178 = vunpack.c.l.s4 1934713408
        %v2179 = vunpack.c.0.s8 %v2178
        %v2180 = vperm.slane %v2172, %v2179
        %v2181 = vrot.slane %v2144, 4
        %v2182 = vsel %vm1001, %v2181, %v2132
        %v2183 = vrot.slane %v2132, 4
        %v2184 = vsel %vm1001, %v2144, %v2183
        %v2186 = vunpack.c.l.s4 1934713408
        %v2187 = vunpack.c.0.s8 %v2186
        %v2188 = vperm.slane %v2182, %v2187
        %v2190 = vunpack.c.l.s4 1934713408
        %v2191 = vunpack.c.0.s8 %v2190
        %v2192 = vperm.slane %v2184, %v2191
        %v2193 = vrot.slane %v2164, 4
        %v2194 = vsel %vm1001, %v2193, %v2152
        %v2195 = vrot.slane %v2152, 4
        %v2196 = vsel %vm1001, %v2164, %v2195
        %v2198 = vunpack.c.l.s4 1934713408
        %v2199 = vunpack.c.0.s8 %v2198
        %v2200 = vperm.slane %v2194, %v2199
        %v2202 = vunpack.c.l.s4 1934713408
        %v2203 = vunpack.c.0.s8 %v2202
        %v2204 = vperm.slane %v2196, %v2203
        %v2205 = vrot.slane %v2168, 4
        %v2206 = vsel %vm1001, %v2205, %v2156
        %v2207 = vrot.slane %v2156, 4
        %v2208 = vsel %vm1001, %v2168, %v2207
        %v2210 = vunpack.c.l.s4 1934713408
        %v2211 = vunpack.c.0.s8 %v2210
        %v2212 = vperm.slane %v2206, %v2211
        %v2214 = vunpack.c.l.s4 1934713408
        %v2215 = vunpack.c.0.s8 %v2214
        %v2216 = vperm.slane %v2208, %v2215
        %v2217 = vrot.slane %v2200, 4
        %v2218 = vsel %vm1001, %v2217, %v2176
        %v2219 = vrot.slane %v2176, 4
        %v2220 = vsel %vm1001, %v2200, %v2219
        %v2221 = vrot.slane %v2204, 4
        %v2222 = vsel %vm1001, %v2221, %v2180
        %v2223 = vrot.slane %v2180, 4
        %v2224 = vsel %vm1001, %v2204, %v2223
        %v2225 = vrot.slane %v2212, 4
        %v2226 = vsel %vm1001, %v2225, %v2188
        %v2227 = vrot.slane %v2188, 4
        %v2228 = vsel %vm1001, %v2212, %v2227
        %v2229 = vrot.slane %v2216, 4
        %v2230 = vsel %vm1001, %v2229, %v2192
        %v2231 = vrot.slane %v2192, 4
        %v2232 = vsel %vm1001, %v2216, %v2231
        %v2233 = vrot.slane %v726, 4
        %v2234 = vsel %vm1001, %v2233, %v700
        %v2235 = vrot.slane %v700, 4
        %v2236 = vsel %vm1001, %v726, %v2235
        %v2238 = vunpack.c.l.s4 1983009808
        %v2239 = vunpack.c.0.s8 %v2238
        %v2240 = vperm.slane %v2234, %v2239
        %v2242 = vunpack.c.l.s4 1983009808
        %v2243 = vunpack.c.0.s8 %v2242
        %v2244 = vperm.slane %v2236, %v2243
        %v2245 = vrot.slane %v739, 4
        %v2246 = vsel %vm1001, %v2245, %v713
        %v2247 = vrot.slane %v713, 4
        %v2248 = vsel %vm1001, %v739, %v2247
        %v2250 = vunpack.c.l.s4 1983009808
        %v2251 = vunpack.c.0.s8 %v2250
        %v2252 = vperm.slane %v2246, %v2251
        %v2254 = vunpack.c.l.s4 1983009808
        %v2255 = vunpack.c.0.s8 %v2254
        %v2256 = vperm.slane %v2248, %v2255
        %v2257 = vrot.slane %v778, 4
        %v2258 = vsel %vm1001, %v2257, %v752
        %v2259 = vrot.slane %v752, 4
        %v2260 = vsel %vm1001, %v778, %v2259
        %v2262 = vunpack.c.l.s4 1983009808
        %v2263 = vunpack.c.0.s8 %v2262
        %v2264 = vperm.slane %v2258, %v2263
        %v2266 = vunpack.c.l.s4 1983009808
        %v2267 = vunpack.c.0.s8 %v2266
        %v2268 = vperm.slane %v2260, %v2267
        %v2269 = vrot.slane %v791, 4
        %v2270 = vsel %vm1001, %v2269, %v765
        %v2271 = vrot.slane %v765, 4
        %v2272 = vsel %vm1001, %v791, %v2271
        %v2274 = vunpack.c.l.s4 1983009808
        %v2275 = vunpack.c.0.s8 %v2274
        %v2276 = vperm.slane %v2270, %v2275
        %v2278 = vunpack.c.l.s4 1983009808
        %v2279 = vunpack.c.0.s8 %v2278
        %v2280 = vperm.slane %v2272, %v2279
        %v2281 = vrot.slane %v2252, 4
        %v2282 = vsel %vm1001, %v2281, %v2240
        %v2283 = vrot.slane %v2240, 4
        %v2284 = vsel %vm1001, %v2252, %v2283
        %v2286 = vunpack.c.l.s4 1934713408
        %v2287 = vunpack.c.0.s8 %v2286
        %v2288 = vperm.slane %v2282, %v2287
        %v2290 = vunpack.c.l.s4 1934713408
        %v2291 = vunpack.c.0.s8 %v2290
        %v2292 = vperm.slane %v2284, %v2291
        %v2293 = vrot.slane %v2256, 4
        %v2294 = vsel %vm1001, %v2293, %v2244
        %v2295 = vrot.slane %v2244, 4
        %v2296 = vsel %vm1001, %v2256, %v2295
        %v2298 = vunpack.c.l.s4 1934713408
        %v2299 = vunpack.c.0.s8 %v2298
        %v2300 = vperm.slane %v2294, %v2299
        %v2302 = vunpack.c.l.s4 1934713408
        %v2303 = vunpack.c.0.s8 %v2302
        %v2304 = vperm.slane %v2296, %v2303
        %v2305 = vrot.slane %v2276, 4
        %v2306 = vsel %vm1001, %v2305, %v2264
        %v2307 = vrot.slane %v2264, 4
        %v2308 = vsel %vm1001, %v2276, %v2307
        %v2310 = vunpack.c.l.s4 1934713408
        %v2311 = vunpack.c.0.s8 %v2310
        %v2312 = vperm.slane %v2306, %v2311
        %v2314 = vunpack.c.l.s4 1934713408
        %v2315 = vunpack.c.0.s8 %v2314
        %v2316 = vperm.slane %v2308, %v2315
        %v2317 = vrot.slane %v2280, 4
        %v2318 = vsel %vm1001, %v2317, %v2268
        %v2319 = vrot.slane %v2268, 4
        %v2320 = vsel %vm1001, %v2280, %v2319
        %v2322 = vunpack.c.l.s4 1934713408
        %v2323 = vunpack.c.0.s8 %v2322
        %v2324 = vperm.slane %v2318, %v2323
        %v2326 = vunpack.c.l.s4 1934713408
        %v2327 = vunpack.c.0.s8 %v2326
        %v2328 = vperm.slane %v2320, %v2327
        %v2329 = vrot.slane %v2312, 4
        %v2330 = vsel %vm1001, %v2329, %v2288
        %v2331 = vrot.slane %v2288, 4
        %v2332 = vsel %vm1001, %v2312, %v2331
        %v2333 = vrot.slane %v2316, 4
        %v2334 = vsel %vm1001, %v2333, %v2292
        %v2335 = vrot.slane %v2292, 4
        %v2336 = vsel %vm1001, %v2316, %v2335
        %v2337 = vrot.slane %v2324, 4
        %v2338 = vsel %vm1001, %v2337, %v2300
        %v2339 = vrot.slane %v2300, 4
        %v2340 = vsel %vm1001, %v2324, %v2339
        %v2341 = vrot.slane %v2328, 4
        %v2342 = vsel %vm1001, %v2341, %v2304
        %v2343 = vrot.slane %v2304, 4
        %v2344 = vsel %vm1001, %v2328, %v2343
        %v2345 = vrot.slane %v824, 4
        %v2346 = vsel %vm1001, %v2345, %v798
        %v2347 = vrot.slane %v798, 4
        %v2348 = vsel %vm1001, %v824, %v2347
        %v2350 = vunpack.c.l.s4 1983009808
        %v2351 = vunpack.c.0.s8 %v2350
        %v2352 = vperm.slane %v2346, %v2351
        %v2354 = vunpack.c.l.s4 1983009808
        %v2355 = vunpack.c.0.s8 %v2354
        %v2356 = vperm.slane %v2348, %v2355
        %v2357 = vrot.slane %v837, 4
        %v2358 = vsel %vm1001, %v2357, %v811
        %v2359 = vrot.slane %v811, 4
        %v2360 = vsel %vm1001, %v837, %v2359
        %v2362 = vunpack.c.l.s4 1983009808
        %v2363 = vunpack.c.0.s8 %v2362
        %v2364 = vperm.slane %v2358, %v2363
        %v2366 = vunpack.c.l.s4 1983009808
        %v2367 = vunpack.c.0.s8 %v2366
        %v2368 = vperm.slane %v2360, %v2367
        %v2369 = vrot.slane %v876, 4
        %v2370 = vsel %vm1001, %v2369, %v850
        %v2371 = vrot.slane %v850, 4
        %v2372 = vsel %vm1001, %v876, %v2371
        %v2374 = vunpack.c.l.s4 1983009808
        %v2375 = vunpack.c.0.s8 %v2374
        %v2376 = vperm.slane %v2370, %v2375
        %v2378 = vunpack.c.l.s4 1983009808
        %v2379 = vunpack.c.0.s8 %v2378
        %v2380 = vperm.slane %v2372, %v2379
        %v2381 = vrot.slane %v889, 4
        %v2382 = vsel %vm1001, %v2381, %v863
        %v2383 = vrot.slane %v863, 4
        %v2384 = vsel %vm1001, %v889, %v2383
        %v2386 = vunpack.c.l.s4 1983009808
        %v2387 = vunpack.c.0.s8 %v2386
        %v2388 = vperm.slane %v2382, %v2387
        %v2390 = vunpack.c.l.s4 1983009808
        %v2391 = vunpack.c.0.s8 %v2390
        %v2392 = vperm.slane %v2384, %v2391
        %v2393 = vrot.slane %v2364, 4
        %v2394 = vsel %vm1001, %v2393, %v2352
        %v2395 = vrot.slane %v2352, 4
        %v2396 = vsel %vm1001, %v2364, %v2395
        %v2398 = vunpack.c.l.s4 1934713408
        %v2399 = vunpack.c.0.s8 %v2398
        %v2400 = vperm.slane %v2394, %v2399
        %v2402 = vunpack.c.l.s4 1934713408
        %v2403 = vunpack.c.0.s8 %v2402
        %v2404 = vperm.slane %v2396, %v2403
        %v2405 = vrot.slane %v2368, 4
        %v2406 = vsel %vm1001, %v2405, %v2356
        %v2407 = vrot.slane %v2356, 4
        %v2408 = vsel %vm1001, %v2368, %v2407
        %v2410 = vunpack.c.l.s4 1934713408
        %v2411 = vunpack.c.0.s8 %v2410
        %v2412 = vperm.slane %v2406, %v2411
        %v2414 = vunpack.c.l.s4 1934713408
        %v2415 = vunpack.c.0.s8 %v2414
        %v2416 = vperm.slane %v2408, %v2415
        %v2417 = vrot.slane %v2388, 4
        %v2418 = vsel %vm1001, %v2417, %v2376
        %v2419 = vrot.slane %v2376, 4
        %v2420 = vsel %vm1001, %v2388, %v2419
        %v2422 = vunpack.c.l.s4 1934713408
        %v2423 = vunpack.c.0.s8 %v2422
        %v2424 = vperm.slane %v2418, %v2423
        %v2426 = vunpack.c.l.s4 1934713408
        %v2427 = vunpack.c.0.s8 %v2426
        %v2428 = vperm.slane %v2420, %v2427
        %v2429 = vrot.slane %v2392, 4
        %v2430 = vsel %vm1001, %v2429, %v2380
        %v2431 = vrot.slane %v2380, 4
        %v2432 = vsel %vm1001, %v2392, %v2431
        %v2434 = vunpack.c.l.s4 1934713408
        %v2435 = vunpack.c.0.s8 %v2434
        %v2436 = vperm.slane %v2430, %v2435
        %v2438 = vunpack.c.l.s4 1934713408
        %v2439 = vunpack.c.0.s8 %v2438
        %v2440 = vperm.slane %v2432, %v2439
        %v2441 = vrot.slane %v2424, 4
        %v2442 = vsel %vm1001, %v2441, %v2400
        %v2443 = vrot.slane %v2400, 4
        %v2444 = vsel %vm1001, %v2424, %v2443
        %v2445 = vrot.slane %v2428, 4
        %v2446 = vsel %vm1001, %v2445, %v2404
        %v2447 = vrot.slane %v2404, 4
        %v2448 = vsel %vm1001, %v2428, %v2447
        %v2449 = vrot.slane %v2436, 4
        %v2450 = vsel %vm1001, %v2449, %v2412
        %v2451 = vrot.slane %v2412, 4
        %v2452 = vsel %vm1001, %v2436, %v2451
        %v2453 = vrot.slane %v2440, 4
        %v2454 = vsel %vm1001, %v2453, %v2416
        %v2455 = vrot.slane %v2416, 4
        %v2456 = vsel %vm1001, %v2440, %v2455
        %v2457 = vrot.slane %v928, 4
        %v2458 = vsel %vm1001, %v2457, %v902
        %v2459 = vrot.slane %v902, 4
        %v2460 = vsel %vm1001, %v928, %v2459
        %v2462 = vunpack.c.l.s4 1983009808
        %v2463 = vunpack.c.0.s8 %v2462
        %v2464 = vperm.slane %v2458, %v2463
        %v2466 = vunpack.c.l.s4 1983009808
        %v2467 = vunpack.c.0.s8 %v2466
        %v2468 = vperm.slane %v2460, %v2467
        %v2469 = vrot.slane %v941, 4
        %v2470 = vsel %vm1001, %v2469, %v915
        %v2471 = vrot.slane %v915, 4
        %v2472 = vsel %vm1001, %v941, %v2471
        %v2474 = vunpack.c.l.s4 1983009808
        %v2475 = vunpack.c.0.s8 %v2474
        %v2476 = vperm.slane %v2470, %v2475
        %v2478 = vunpack.c.l.s4 1983009808
        %v2479 = vunpack.c.0.s8 %v2478
        %v2480 = vperm.slane %v2472, %v2479
        %v2481 = vrot.slane %v980, 4
        %v2482 = vsel %vm1001, %v2481, %v954
        %v2483 = vrot.slane %v954, 4
        %v2484 = vsel %vm1001, %v980, %v2483
        %v2486 = vunpack.c.l.s4 1983009808
        %v2487 = vunpack.c.0.s8 %v2486
        %v2488 = vperm.slane %v2482, %v2487
        %v2490 = vunpack.c.l.s4 1983009808
        %v2491 = vunpack.c.0.s8 %v2490
        %v2492 = vperm.slane %v2484, %v2491
        %v2493 = vrot.slane %v993, 4
        %v2494 = vsel %vm1001, %v2493, %v967
        %v2495 = vrot.slane %v967, 4
        %v2496 = vsel %vm1001, %v993, %v2495
        %v2498 = vunpack.c.l.s4 1983009808
        %v2499 = vunpack.c.0.s8 %v2498
        %v2500 = vperm.slane %v2494, %v2499
        %v2502 = vunpack.c.l.s4 1983009808
        %v2503 = vunpack.c.0.s8 %v2502
        %v2504 = vperm.slane %v2496, %v2503
        %v2505 = vrot.slane %v2476, 4
        %v2506 = vsel %vm1001, %v2505, %v2464
        %v2507 = vrot.slane %v2464, 4
        %v2508 = vsel %vm1001, %v2476, %v2507
        %v2510 = vunpack.c.l.s4 1934713408
        %v2511 = vunpack.c.0.s8 %v2510
        %v2512 = vperm.slane %v2506, %v2511
        %v2514 = vunpack.c.l.s4 1934713408
        %v2515 = vunpack.c.0.s8 %v2514
        %v2516 = vperm.slane %v2508, %v2515
        %v2517 = vrot.slane %v2480, 4
        %v2518 = vsel %vm1001, %v2517, %v2468
        %v2519 = vrot.slane %v2468, 4
        %v2520 = vsel %vm1001, %v2480, %v2519
        %v2522 = vunpack.c.l.s4 1934713408
        %v2523 = vunpack.c.0.s8 %v2522
        %v2524 = vperm.slane %v2518, %v2523
        %v2526 = vunpack.c.l.s4 1934713408
        %v2527 = vunpack.c.0.s8 %v2526
        %v2528 = vperm.slane %v2520, %v2527
        %v2529 = vrot.slane %v2500, 4
        %v2530 = vsel %vm1001, %v2529, %v2488
        %v2531 = vrot.slane %v2488, 4
        %v2532 = vsel %vm1001, %v2500, %v2531
        %v2534 = vunpack.c.l.s4 1934713408
        %v2535 = vunpack.c.0.s8 %v2534
        %v2536 = vperm.slane %v2530, %v2535
        %v2538 = vunpack.c.l.s4 1934713408
        %v2539 = vunpack.c.0.s8 %v2538
        %v2540 = vperm.slane %v2532, %v2539
        %v2541 = vrot.slane %v2504, 4
        %v2542 = vsel %vm1001, %v2541, %v2492
        %v2543 = vrot.slane %v2492, 4
        %v2544 = vsel %vm1001, %v2504, %v2543
        %v2546 = vunpack.c.l.s4 1934713408
        %v2547 = vunpack.c.0.s8 %v2546
        %v2548 = vperm.slane %v2542, %v2547
        %v2550 = vunpack.c.l.s4 1934713408
        %v2551 = vunpack.c.0.s8 %v2550
        %v2552 = vperm.slane %v2544, %v2551
        %v2553 = vrot.slane %v2536, 4
        %v2554 = vsel %vm1001, %v2553, %v2512
        %v2555 = vrot.slane %v2512, 4
        %v2556 = vsel %vm1001, %v2536, %v2555
        %v2557 = vrot.slane %v2540, 4
        %v2558 = vsel %vm1001, %v2557, %v2516
        %v2559 = vrot.slane %v2516, 4
        %v2560 = vsel %vm1001, %v2540, %v2559
        %v2561 = vrot.slane %v2548, 4
        %v2562 = vsel %vm1001, %v2561, %v2524
        %v2563 = vrot.slane %v2524, 4
        %v2564 = vsel %vm1001, %v2548, %v2563
        %v2565 = vrot.slane %v2552, 4
        %v2566 = vsel %vm1001, %v2565, %v2528
        %v2567 = vrot.slane %v2528, 4
        %v2568 = vsel %vm1001, %v2552, %v2567
        %v2569 = vrot.slane %v830, 4
        %v2570 = vsel %vm1001, %v2569, %v804
        %v2571 = vrot.slane %v804, 4
        %v2572 = vsel %vm1001, %v830, %v2571
        %v2574 = vunpack.c.l.s4 1983009808
        %v2575 = vunpack.c.0.s8 %v2574
        %v2576 = vperm.slane %v2570, %v2575
        %v2578 = vunpack.c.l.s4 1983009808
        %v2579 = vunpack.c.0.s8 %v2578
        %v2580 = vperm.slane %v2572, %v2579
        %v2581 = vrot.slane %v843, 4
        %v2582 = vsel %vm1001, %v2581, %v817
        %v2583 = vrot.slane %v817, 4
        %v2584 = vsel %vm1001, %v843, %v2583
        %v2586 = vunpack.c.l.s4 1983009808
        %v2587 = vunpack.c.0.s8 %v2586
        %v2588 = vperm.slane %v2582, %v2587
        %v2590 = vunpack.c.l.s4 1983009808
        %v2591 = vunpack.c.0.s8 %v2590
        %v2592 = vperm.slane %v2584, %v2591
        %v2593 = vrot.slane %v882, 4
        %v2594 = vsel %vm1001, %v2593, %v856
        %v2595 = vrot.slane %v856, 4
        %v2596 = vsel %vm1001, %v882, %v2595
        %v2598 = vunpack.c.l.s4 1983009808
        %v2599 = vunpack.c.0.s8 %v2598
        %v2600 = vperm.slane %v2594, %v2599
        %v2602 = vunpack.c.l.s4 1983009808
        %v2603 = vunpack.c.0.s8 %v2602
        %v2604 = vperm.slane %v2596, %v2603
        %v2605 = vrot.slane %v895, 4
        %v2606 = vsel %vm1001, %v2605, %v869
        %v2607 = vrot.slane %v869, 4
        %v2608 = vsel %vm1001, %v895, %v2607
        %v2610 = vunpack.c.l.s4 1983009808
        %v2611 = vunpack.c.0.s8 %v2610
        %v2612 = vperm.slane %v2606, %v2611
        %v2614 = vunpack.c.l.s4 1983009808
        %v2615 = vunpack.c.0.s8 %v2614
        %v2616 = vperm.slane %v2608, %v2615
        %v2617 = vrot.slane %v2588, 4
        %v2618 = vsel %vm1001, %v2617, %v2576
        %v2619 = vrot.slane %v2576, 4
        %v2620 = vsel %vm1001, %v2588, %v2619
        %v2622 = vunpack.c.l.s4 1934713408
        %v2623 = vunpack.c.0.s8 %v2622
        %v2624 = vperm.slane %v2618, %v2623
        %v2626 = vunpack.c.l.s4 1934713408
        %v2627 = vunpack.c.0.s8 %v2626
        %v2628 = vperm.slane %v2620, %v2627
        %v2629 = vrot.slane %v2592, 4
        %v2630 = vsel %vm1001, %v2629, %v2580
        %v2631 = vrot.slane %v2580, 4
        %v2632 = vsel %vm1001, %v2592, %v2631
        %v2634 = vunpack.c.l.s4 1934713408
        %v2635 = vunpack.c.0.s8 %v2634
        %v2636 = vperm.slane %v2630, %v2635
        %v2638 = vunpack.c.l.s4 1934713408
        %v2639 = vunpack.c.0.s8 %v2638
        %v2640 = vperm.slane %v2632, %v2639
        %v2641 = vrot.slane %v2612, 4
        %v2642 = vsel %vm1001, %v2641, %v2600
        %v2643 = vrot.slane %v2600, 4
        %v2644 = vsel %vm1001, %v2612, %v2643
        %v2646 = vunpack.c.l.s4 1934713408
        %v2647 = vunpack.c.0.s8 %v2646
        %v2648 = vperm.slane %v2642, %v2647
        %v2650 = vunpack.c.l.s4 1934713408
        %v2651 = vunpack.c.0.s8 %v2650
        %v2652 = vperm.slane %v2644, %v2651
        %v2653 = vrot.slane %v2616, 4
        %v2654 = vsel %vm1001, %v2653, %v2604
        %v2655 = vrot.slane %v2604, 4
        %v2656 = vsel %vm1001, %v2616, %v2655
        %v2658 = vunpack.c.l.s4 1934713408
        %v2659 = vunpack.c.0.s8 %v2658
        %v2660 = vperm.slane %v2654, %v2659
        %v2662 = vunpack.c.l.s4 1934713408
        %v2663 = vunpack.c.0.s8 %v2662
        %v2664 = vperm.slane %v2656, %v2663
        %v2665 = vrot.slane %v2648, 4
        %v2666 = vsel %vm1001, %v2665, %v2624
        %v2667 = vrot.slane %v2624, 4
        %v2668 = vsel %vm1001, %v2648, %v2667
        %v2669 = vrot.slane %v2652, 4
        %v2670 = vsel %vm1001, %v2669, %v2628
        %v2671 = vrot.slane %v2628, 4
        %v2672 = vsel %vm1001, %v2652, %v2671
        %v2673 = vrot.slane %v2660, 4
        %v2674 = vsel %vm1001, %v2673, %v2636
        %v2675 = vrot.slane %v2636, 4
        %v2676 = vsel %vm1001, %v2660, %v2675
        %v2677 = vrot.slane %v2664, 4
        %v2678 = vsel %vm1001, %v2677, %v2640
        %v2679 = vrot.slane %v2640, 4
        %v2680 = vsel %vm1001, %v2664, %v2679
        %v2681 = vrot.slane %v934, 4
        %v2682 = vsel %vm1001, %v2681, %v908
        %v2683 = vrot.slane %v908, 4
        %v2684 = vsel %vm1001, %v934, %v2683
        %v2686 = vunpack.c.l.s4 1983009808
        %v2687 = vunpack.c.0.s8 %v2686
        %v2688 = vperm.slane %v2682, %v2687
        %v2690 = vunpack.c.l.s4 1983009808
        %v2691 = vunpack.c.0.s8 %v2690
        %v2692 = vperm.slane %v2684, %v2691
        %v2693 = vrot.slane %v947, 4
        %v2694 = vsel %vm1001, %v2693, %v921
        %v2695 = vrot.slane %v921, 4
        %v2696 = vsel %vm1001, %v947, %v2695
        %v2698 = vunpack.c.l.s4 1983009808
        %v2699 = vunpack.c.0.s8 %v2698
        %v2700 = vperm.slane %v2694, %v2699
        %v2702 = vunpack.c.l.s4 1983009808
        %v2703 = vunpack.c.0.s8 %v2702
        %v2704 = vperm.slane %v2696, %v2703
        %v2705 = vrot.slane %v986, 4
        %v2706 = vsel %vm1001, %v2705, %v960
        %v2707 = vrot.slane %v960, 4
        %v2708 = vsel %vm1001, %v986, %v2707
        %v2710 = vunpack.c.l.s4 1983009808
        %v2711 = vunpack.c.0.s8 %v2710
        %v2712 = vperm.slane %v2706, %v2711
        %v2714 = vunpack.c.l.s4 1983009808
        %v2715 = vunpack.c.0.s8 %v2714
        %v2716 = vperm.slane %v2708, %v2715
        %v2717 = vrot.slane %v999, 4
        %v2718 = vsel %vm1001, %v2717, %v973
        %v2719 = vrot.slane %v973, 4
        %v2720 = vsel %vm1001, %v999, %v2719
        %v2722 = vunpack.c.l.s4 1983009808
        %v2723 = vunpack.c.0.s8 %v2722
        %v2724 = vperm.slane %v2718, %v2723
        %v2726 = vunpack.c.l.s4 1983009808
        %v2727 = vunpack.c.0.s8 %v2726
        %v2728 = vperm.slane %v2720, %v2727
        %v2729 = vrot.slane %v2700, 4
        %v2730 = vsel %vm1001, %v2729, %v2688
        %v2731 = vrot.slane %v2688, 4
        %v2732 = vsel %vm1001, %v2700, %v2731
        %v2734 = vunpack.c.l.s4 1934713408
        %v2735 = vunpack.c.0.s8 %v2734
        %v2736 = vperm.slane %v2730, %v2735
        %v2738 = vunpack.c.l.s4 1934713408
        %v2739 = vunpack.c.0.s8 %v2738
        %v2740 = vperm.slane %v2732, %v2739
        %v2741 = vrot.slane %v2704, 4
        %v2742 = vsel %vm1001, %v2741, %v2692
        %v2743 = vrot.slane %v2692, 4
        %v2744 = vsel %vm1001, %v2704, %v2743
        %v2746 = vunpack.c.l.s4 1934713408
        %v2747 = vunpack.c.0.s8 %v2746
        %v2748 = vperm.slane %v2742, %v2747
        %v2750 = vunpack.c.l.s4 1934713408
        %v2751 = vunpack.c.0.s8 %v2750
        %v2752 = vperm.slane %v2744, %v2751
        %v2753 = vrot.slane %v2724, 4
        %v2754 = vsel %vm1001, %v2753, %v2712
        %v2755 = vrot.slane %v2712, 4
        %v2756 = vsel %vm1001, %v2724, %v2755
        %v2758 = vunpack.c.l.s4 1934713408
        %v2759 = vunpack.c.0.s8 %v2758
        %v2760 = vperm.slane %v2754, %v2759
        %v2762 = vunpack.c.l.s4 1934713408
        %v2763 = vunpack.c.0.s8 %v2762
        %v2764 = vperm.slane %v2756, %v2763
        %v2765 = vrot.slane %v2728, 4
        %v2766 = vsel %vm1001, %v2765, %v2716
        %v2767 = vrot.slane %v2716, 4
        %v2768 = vsel %vm1001, %v2728, %v2767
        %v2770 = vunpack.c.l.s4 1934713408
        %v2771 = vunpack.c.0.s8 %v2770
        %v2772 = vperm.slane %v2766, %v2771
        %v2774 = vunpack.c.l.s4 1934713408
        %v2775 = vunpack.c.0.s8 %v2774
        %v2776 = vperm.slane %v2768, %v2775
        %v2777 = vrot.slane %v2760, 4
        %v2778 = vsel %vm1001, %v2777, %v2736
        %v2779 = vrot.slane %v2736, 4
        %v2780 = vsel %vm1001, %v2760, %v2779
        %v2781 = vrot.slane %v2764, 4
        %v2782 = vsel %vm1001, %v2781, %v2740
        %v2783 = vrot.slane %v2740, 4
        %v2784 = vsel %vm1001, %v2764, %v2783
        %v2785 = vrot.slane %v2772, 4
        %v2786 = vsel %vm1001, %v2785, %v2748
        %v2787 = vrot.slane %v2748, 4
        %v2788 = vsel %vm1001, %v2772, %v2787
        %v2789 = vrot.slane %v2776, 4
        %v2790 = vsel %vm1001, %v2789, %v2752
        %v2791 = vrot.slane %v2752, 4
        %v2792 = vsel %vm1001, %v2776, %v2791
        %2801 = vrot.lane.b32.xlu0 %v1100, 2
        %v2802 = vpop.permute.xlu0 %2801
        %2803 = vrot.lane.b32.xlu0 %v1212, 2
        %v2804 = vpop.permute.xlu0 %2803
        %2805 = vrot.lane.b32.xlu0 %v1548, 2
        %v2806 = vpop.permute.xlu0 %2805
        %2807 = vrot.lane.b32.xlu0 %v1660, 2
        %v2808 = vpop.permute.xlu0 %2807
        %2809 = vrot.lane.b32.xlu0 %v1996, 2
        %v2810 = vpop.permute.xlu0 %2809
        %2811 = vrot.lane.b32.xlu0 %v2108, 2
        %v2812 = vpop.permute.xlu0 %2811
        %2813 = vrot.lane.b32.xlu0 %v2444, 2
        %v2814 = vpop.permute.xlu0 %2813
        %2815 = vrot.lane.b32.xlu0 %v2556, 2
        %v2816 = vpop.permute.xlu0 %2815
        %2833 = vrot.lane.b32.xlu0 %v1102, 4
        %v2834 = vpop.permute.xlu0 %2833
        %2835 = vrot.lane.b32.xlu0 %v1214, 4
        %v2836 = vpop.permute.xlu0 %2835
        %2837 = vrot.lane.b32.xlu0 %v1550, 4
        %v2838 = vpop.permute.xlu0 %2837
        %2839 = vrot.lane.b32.xlu0 %v1662, 4
        %v2840 = vpop.permute.xlu0 %2839
        %2841 = vrot.lane.b32.xlu0 %v1998, 4
        %v2842 = vpop.permute.xlu0 %2841
        %2843 = vrot.lane.b32.xlu0 %v2110, 4
        %v2844 = vpop.permute.xlu0 %2843
        %2845 = vrot.lane.b32.xlu0 %v2446, 4
        %v2846 = vpop.permute.xlu0 %2845
        %2847 = vrot.lane.b32.xlu0 %v2558, 4
        %v2848 = vpop.permute.xlu0 %2847
        %2865 = vrot.lane.b32.xlu0 %v1104, 6
        %v2866 = vpop.permute.xlu0 %2865
        %2867 = vrot.lane.b32.xlu0 %v1216, 6
        %v2868 = vpop.permute.xlu0 %2867
        %2869 = vrot.lane.b32.xlu0 %v1552, 6
        %v2870 = vpop.permute.xlu0 %2869
        %2871 = vrot.lane.b32.xlu0 %v1664, 6
        %v2872 = vpop.permute.xlu0 %2871
        %2873 = vrot.lane.b32.xlu0 %v2000, 6
        %v2874 = vpop.permute.xlu0 %2873
        %2875 = vrot.lane.b32.xlu0 %v2112, 6
        %v2876 = vpop.permute.xlu0 %2875
        %2877 = vrot.lane.b32.xlu0 %v2448, 6
        %v2878 = vpop.permute.xlu0 %2877
        %2879 = vrot.lane.b32.xlu0 %v2560, 6
        %v2880 = vpop.permute.xlu0 %2879
        %2897 = vrot.lane.b32.xlu0 %v1106, 8
        %v2898 = vpop.permute.xlu0 %2897
        %2899 = vrot.lane.b32.xlu0 %v1218, 8
        %v2900 = vpop.permute.xlu0 %2899
        %2901 = vrot.lane.b32.xlu0 %v1554, 8
        %v2902 = vpop.permute.xlu0 %2901
        %2903 = vrot.lane.b32.xlu0 %v1666, 8
        %v2904 = vpop.permute.xlu0 %2903
        %2905 = vrot.lane.b32.xlu0 %v2002, 8
        %v2906 = vpop.permute.xlu0 %2905
        %2907 = vrot.lane.b32.xlu0 %v2114, 8
        %v2908 = vpop.permute.xlu0 %2907
        %2909 = vrot.lane.b32.xlu0 %v2450, 8
        %v2910 = vpop.permute.xlu0 %2909
        %2911 = vrot.lane.b32.xlu0 %v2562, 8
        %v2912 = vpop.permute.xlu0 %2911
        %2929 = vrot.lane.b32.xlu0 %v1108, 10
        %v2930 = vpop.permute.xlu0 %2929
        %2931 = vrot.lane.b32.xlu0 %v1220, 10
        %v2932 = vpop.permute.xlu0 %2931
        %2933 = vrot.lane.b32.xlu0 %v1556, 10
        %v2934 = vpop.permute.xlu0 %2933
        %2935 = vrot.lane.b32.xlu0 %v1668, 10
        %v2936 = vpop.permute.xlu0 %2935
        %2937 = vrot.lane.b32.xlu0 %v2004, 10
        %v2938 = vpop.permute.xlu0 %2937
        %2939 = vrot.lane.b32.xlu0 %v2116, 10
        %v2940 = vpop.permute.xlu0 %2939
        %2941 = vrot.lane.b32.xlu0 %v2452, 10
        %v2942 = vpop.permute.xlu0 %2941
        %2943 = vrot.lane.b32.xlu0 %v2564, 10
        %v2944 = vpop.permute.xlu0 %2943
        %2961 = vrot.lane.b32.xlu0 %v1110, 12
        %v2962 = vpop.permute.xlu0 %2961
        %2963 = vrot.lane.b32.xlu0 %v1222, 12
        %v2964 = vpop.permute.xlu0 %2963
        %2965 = vrot.lane.b32.xlu0 %v1558, 12
        %v2966 = vpop.permute.xlu0 %2965
        %2967 = vrot.lane.b32.xlu0 %v1670, 12
        %v2968 = vpop.permute.xlu0 %2967
        %2969 = vrot.lane.b32.xlu0 %v2006, 12
        %v2970 = vpop.permute.xlu0 %2969
        %2971 = vrot.lane.b32.xlu0 %v2118, 12
        %v2972 = vpop.permute.xlu0 %2971
        %2973 = vrot.lane.b32.xlu0 %v2454, 12
        %v2974 = vpop.permute.xlu0 %2973
        %2975 = vrot.lane.b32.xlu0 %v2566, 12
        %v2976 = vpop.permute.xlu0 %2975
        %2993 = vrot.lane.b32.xlu0 %v1112, 14
        %v2994 = vpop.permute.xlu0 %2993
        %2995 = vrot.lane.b32.xlu0 %v1224, 14
        %v2996 = vpop.permute.xlu0 %2995
        %2997 = vrot.lane.b32.xlu0 %v1560, 14
        %v2998 = vpop.permute.xlu0 %2997
        %2999 = vrot.lane.b32.xlu0 %v1672, 14
        %v3000 = vpop.permute.xlu0 %2999
        %3001 = vrot.lane.b32.xlu0 %v2008, 14
        %v3002 = vpop.permute.xlu0 %3001
        %3003 = vrot.lane.b32.xlu0 %v2120, 14
        %v3004 = vpop.permute.xlu0 %3003
        %3005 = vrot.lane.b32.xlu0 %v2456, 14
        %v3006 = vpop.permute.xlu0 %3005
        %3007 = vrot.lane.b32.xlu0 %v2568, 14
        %v3008 = vpop.permute.xlu0 %3007
        %3025 = vrot.lane.b32.xlu0 %v1322, 16
        %v3026 = vpop.permute.xlu0 %3025
        %3027 = vrot.lane.b32.xlu0 %v1434, 16
        %v3028 = vpop.permute.xlu0 %3027
        %3029 = vrot.lane.b32.xlu0 %v1770, 16
        %v3030 = vpop.permute.xlu0 %3029
        %3031 = vrot.lane.b32.xlu0 %v1882, 16
        %v3032 = vpop.permute.xlu0 %3031
        %3033 = vrot.lane.b32.xlu0 %v2218, 16
        %v3034 = vpop.permute.xlu0 %3033
        %3035 = vrot.lane.b32.xlu0 %v2330, 16
        %v3036 = vpop.permute.xlu0 %3035
        %3037 = vrot.lane.b32.xlu0 %v2666, 16
        %v3038 = vpop.permute.xlu0 %3037
        %3039 = vrot.lane.b32.xlu0 %v2778, 16
        %v3040 = vpop.permute.xlu0 %3039
        %3057 = vrot.lane.b32.xlu0 %v1324, 18
        %v3058 = vpop.permute.xlu0 %3057
        %3059 = vrot.lane.b32.xlu0 %v1436, 18
        %v3060 = vpop.permute.xlu0 %3059
        %3061 = vrot.lane.b32.xlu0 %v1772, 18
        %v3062 = vpop.permute.xlu0 %3061
        %3063 = vrot.lane.b32.xlu0 %v1884, 18
        %v3064 = vpop.permute.xlu0 %3063
        %3065 = vrot.lane.b32.xlu0 %v2220, 18
        %v3066 = vpop.permute.xlu0 %3065
        %3067 = vrot.lane.b32.xlu0 %v2332, 18
        %v3068 = vpop.permute.xlu0 %3067
        %3069 = vrot.lane.b32.xlu0 %v2668, 18
        %v3070 = vpop.permute.xlu0 %3069
        %3071 = vrot.lane.b32.xlu0 %v2780, 18
        %v3072 = vpop.permute.xlu0 %3071
        %3089 = vrot.lane.b32.xlu0 %v1326, 20
        %v3090 = vpop.permute.xlu0 %3089
        %3091 = vrot.lane.b32.xlu0 %v1438, 20
        %v3092 = vpop.permute.xlu0 %3091
        %3093 = vrot.lane.b32.xlu0 %v1774, 20
        %v3094 = vpop.permute.xlu0 %3093
        %3095 = vrot.lane.b32.xlu0 %v1886, 20
        %v3096 = vpop.permute.xlu0 %3095
        %3097 = vrot.lane.b32.xlu0 %v2222, 20
        %v3098 = vpop.permute.xlu0 %3097
        %3099 = vrot.lane.b32.xlu0 %v2334, 20
        %v3100 = vpop.permute.xlu0 %3099
        %3101 = vrot.lane.b32.xlu0 %v2670, 20
        %v3102 = vpop.permute.xlu0 %3101
        %3103 = vrot.lane.b32.xlu0 %v2782, 20
        %v3104 = vpop.permute.xlu0 %3103
        %3121 = vrot.lane.b32.xlu0 %v1328, 22
        %v3122 = vpop.permute.xlu0 %3121
        %3123 = vrot.lane.b32.xlu0 %v1440, 22
        %v3124 = vpop.permute.xlu0 %3123
        %3125 = vrot.lane.b32.xlu0 %v1776, 22
        %v3126 = vpop.permute.xlu0 %3125
        %3127 = vrot.lane.b32.xlu0 %v1888, 22
        %v3128 = vpop.permute.xlu0 %3127
        %3129 = vrot.lane.b32.xlu0 %v2224, 22
        %v3130 = vpop.permute.xlu0 %3129
        %3131 = vrot.lane.b32.xlu0 %v2336, 22
        %v3132 = vpop.permute.xlu0 %3131
        %3133 = vrot.lane.b32.xlu0 %v2672, 22
        %v3134 = vpop.permute.xlu0 %3133
        %3135 = vrot.lane.b32.xlu0 %v2784, 22
        %v3136 = vpop.permute.xlu0 %3135
        %3153 = vrot.lane.b32.xlu0 %v1330, 24
        %v3154 = vpop.permute.xlu0 %3153
        %3155 = vrot.lane.b32.xlu0 %v1442, 24
        %v3156 = vpop.permute.xlu0 %3155
        %3157 = vrot.lane.b32.xlu0 %v1778, 24
        %v3158 = vpop.permute.xlu0 %3157
        %3159 = vrot.lane.b32.xlu0 %v1890, 24
        %v3160 = vpop.permute.xlu0 %3159
        %3161 = vrot.lane.b32.xlu0 %v2226, 24
        %v3162 = vpop.permute.xlu0 %3161
        %3163 = vrot.lane.b32.xlu0 %v2338, 24
        %v3164 = vpop.permute.xlu0 %3163
        %3165 = vrot.lane.b32.xlu0 %v2674, 24
        %v3166 = vpop.permute.xlu0 %3165
        %3167 = vrot.lane.b32.xlu0 %v2786, 24
        %v3168 = vpop.permute.xlu0 %3167
        %3185 = vrot.lane.b32.xlu0 %v1332, 26
        %v3186 = vpop.permute.xlu0 %3185
        %3187 = vrot.lane.b32.xlu0 %v1444, 26
        %v3188 = vpop.permute.xlu0 %3187
        %3189 = vrot.lane.b32.xlu0 %v1780, 26
        %v3190 = vpop.permute.xlu0 %3189
        %3191 = vrot.lane.b32.xlu0 %v1892, 26
        %v3192 = vpop.permute.xlu0 %3191
        %3193 = vrot.lane.b32.xlu0 %v2228, 26
        %v3194 = vpop.permute.xlu0 %3193
        %3195 = vrot.lane.b32.xlu0 %v2340, 26
        %v3196 = vpop.permute.xlu0 %3195
        %3197 = vrot.lane.b32.xlu0 %v2676, 26
        %v3198 = vpop.permute.xlu0 %3197
        %3199 = vrot.lane.b32.xlu0 %v2788, 26
        %v3200 = vpop.permute.xlu0 %3199
        %3217 = vrot.lane.b32.xlu0 %v1334, 28
        %v3218 = vpop.permute.xlu0 %3217
        %3219 = vrot.lane.b32.xlu0 %v1446, 28
        %v3220 = vpop.permute.xlu0 %3219
        %3221 = vrot.lane.b32.xlu0 %v1782, 28
        %v3222 = vpop.permute.xlu0 %3221
        %3223 = vrot.lane.b32.xlu0 %v1894, 28
        %v3224 = vpop.permute.xlu0 %3223
        %3225 = vrot.lane.b32.xlu0 %v2230, 28
        %v3226 = vpop.permute.xlu0 %3225
        %3227 = vrot.lane.b32.xlu0 %v2342, 28
        %v3228 = vpop.permute.xlu0 %3227
        %3229 = vrot.lane.b32.xlu0 %v2678, 28
        %v3230 = vpop.permute.xlu0 %3229
        %3231 = vrot.lane.b32.xlu0 %v2790, 28
        %v3232 = vpop.permute.xlu0 %3231
        %3249 = vrot.lane.b32.xlu0 %v1336, 30
        %v3250 = vpop.permute.xlu0 %3249
        %3251 = vrot.lane.b32.xlu0 %v1448, 30
        %v3252 = vpop.permute.xlu0 %3251
        %3253 = vrot.lane.b32.xlu0 %v1784, 30
        %v3254 = vpop.permute.xlu0 %3253
        %3255 = vrot.lane.b32.xlu0 %v1896, 30
        %v3256 = vpop.permute.xlu0 %3255
        %3257 = vrot.lane.b32.xlu0 %v2232, 30
        %v3258 = vpop.permute.xlu0 %3257
        %3259 = vrot.lane.b32.xlu0 %v2344, 30
        %v3260 = vpop.permute.xlu0 %3259
        %3261 = vrot.lane.b32.xlu0 %v2680, 30
        %v3262 = vpop.permute.xlu0 %3261
        %3263 = vrot.lane.b32.xlu0 %v2792, 30
        %v3264 = vpop.permute.xlu0 %3263
        %vm3273 = vcmask 15360
        %v3274 = vsel %vm3273, %v1098, %v2802
        %v3275 = vsel %vm3273, %v1210, %v2804
        %v3276 = vsel %vm3273, %v1546, %v2806
        %v3277 = vsel %vm3273, %v1658, %v2808
        %v3278 = vsel %vm3273, %v1994, %v2810
        %v3279 = vsel %vm3273, %v2106, %v2812
        %v3280 = vsel %vm3273, %v2442, %v2814
        %v3281 = vsel %vm3273, %v2554, %v2816
        %vm3282 = vcmask 31744
        %v3283 = vsel %vm3282, %v3274, %v2834
        %v3284 = vsel %vm3282, %v3275, %v2836
        %v3285 = vsel %vm3282, %v3276, %v2838
        %v3286 = vsel %vm3282, %v3277, %v2840
        %v3287 = vsel %vm3282, %v3278, %v2842
        %v3288 = vsel %vm3282, %v3279, %v2844
        %v3289 = vsel %vm3282, %v3280, %v2846
        %v3290 = vsel %vm3282, %v3281, %v2848
        %vm3291 = vcmask 48128
        %v3292 = vsel %vm3291, %v3283, %v2866
        %v3293 = vsel %vm3291, %v3284, %v2868
        %v3294 = vsel %vm3291, %v3285, %v2870
        %v3295 = vsel %vm3291, %v3286, %v2872
        %v3296 = vsel %vm3291, %v3287, %v2874
        %v3297 = vsel %vm3291, %v3288, %v2876
        %v3298 = vsel %vm3291, %v3289, %v2878
        %v3299 = vsel %vm3291, %v3290, %v2880
        %vm3300 = vcmask 64512
        %v3301 = vsel %vm3300, %v3292, %v2898
        %v3302 = vsel %vm3300, %v3293, %v2900
        %v3303 = vsel %vm3300, %v3294, %v2902
        %v3304 = vsel %vm3300, %v3295, %v2904
        %v3305 = vsel %vm3300, %v3296, %v2906
        %v3306 = vsel %vm3300, %v3297, %v2908
        %v3307 = vsel %vm3300, %v3298, %v2910
        %v3308 = vsel %vm3300, %v3299, %v2912
        %vm3309 = vcmask 80896
        %v3310 = vsel %vm3309, %v3301, %v2930
        %v3311 = vsel %vm3309, %v3302, %v2932
        %v3312 = vsel %vm3309, %v3303, %v2934
        %v3313 = vsel %vm3309, %v3304, %v2936
        %v3314 = vsel %vm3309, %v3305, %v2938
        %v3315 = vsel %vm3309, %v3306, %v2940
        %v3316 = vsel %vm3309, %v3307, %v2942
        %v3317 = vsel %vm3309, %v3308, %v2944
        %vm3318 = vcmask 97280
        %v3319 = vsel %vm3318, %v3310, %v2962
        %v3320 = vsel %vm3318, %v3311, %v2964
        %v3321 = vsel %vm3318, %v3312, %v2966
        %v3322 = vsel %vm3318, %v3313, %v2968
        %v3323 = vsel %vm3318, %v3314, %v2970
        %v3324 = vsel %vm3318, %v3315, %v2972
        %v3325 = vsel %vm3318, %v3316, %v2974
        %v3326 = vsel %vm3318, %v3317, %v2976
        %vm3327 = vcmask 113664
        %v3328 = vsel %vm3327, %v3319, %v2994
        %v3329 = vsel %vm3327, %v3320, %v2996
        %v3330 = vsel %vm3327, %v3321, %v2998
        %v3331 = vsel %vm3327, %v3322, %v3000
        %v3332 = vsel %vm3327, %v3323, %v3002
        %v3333 = vsel %vm3327, %v3324, %v3004
        %v3334 = vsel %vm3327, %v3325, %v3006
        %v3335 = vsel %vm3327, %v3326, %v3008
        %vm3336 = vcmask 130048
        %v3337 = vsel %vm3336, %v3328, %v3026
        %v3338 = vsel %vm3336, %v3329, %v3028
        %v3339 = vsel %vm3336, %v3330, %v3030
        %v3340 = vsel %vm3336, %v3331, %v3032
        %v3341 = vsel %vm3336, %v3332, %v3034
        %v3342 = vsel %vm3336, %v3333, %v3036
        %v3343 = vsel %vm3336, %v3334, %v3038
        %v3344 = vsel %vm3336, %v3335, %v3040
        %vm3345 = vcmask 146432
        %v3346 = vsel %vm3345, %v3337, %v3058
        %v3347 = vsel %vm3345, %v3338, %v3060
        %v3348 = vsel %vm3345, %v3339, %v3062
        %v3349 = vsel %vm3345, %v3340, %v3064
        %v3350 = vsel %vm3345, %v3341, %v3066
        %v3351 = vsel %vm3345, %v3342, %v3068
        %v3352 = vsel %vm3345, %v3343, %v3070
        %v3353 = vsel %vm3345, %v3344, %v3072
        %vm3354 = vcmask 162816
        %v3355 = vsel %vm3354, %v3346, %v3090
        %v3356 = vsel %vm3354, %v3347, %v3092
        %v3357 = vsel %vm3354, %v3348, %v3094
        %v3358 = vsel %vm3354, %v3349, %v3096
        %v3359 = vsel %vm3354, %v3350, %v3098
        %v3360 = vsel %vm3354, %v3351, %v3100
        %v3361 = vsel %vm3354, %v3352, %v3102
        %v3362 = vsel %vm3354, %v3353, %v3104
        %vm3363 = vcmask 179200
        %v3364 = vsel %vm3363, %v3355, %v3122
        %v3365 = vsel %vm3363, %v3356, %v3124
        %v3366 = vsel %vm3363, %v3357, %v3126
        %v3367 = vsel %vm3363, %v3358, %v3128
        %v3368 = vsel %vm3363, %v3359, %v3130
        %v3369 = vsel %vm3363, %v3360, %v3132
        %v3370 = vsel %vm3363, %v3361, %v3134
        %v3371 = vsel %vm3363, %v3362, %v3136
        %vm3372 = vcmask 195584
        %v3373 = vsel %vm3372, %v3364, %v3154
        %v3374 = vsel %vm3372, %v3365, %v3156
        %v3375 = vsel %vm3372, %v3366, %v3158
        %v3376 = vsel %vm3372, %v3367, %v3160
        %v3377 = vsel %vm3372, %v3368, %v3162
        %v3378 = vsel %vm3372, %v3369, %v3164
        %v3379 = vsel %vm3372, %v3370, %v3166
        %v3380 = vsel %vm3372, %v3371, %v3168
        %vm3381 = vcmask 211968
        %v3382 = vsel %vm3381, %v3373, %v3186
        %v3383 = vsel %vm3381, %v3374, %v3188
        %v3384 = vsel %vm3381, %v3375, %v3190
        %v3385 = vsel %vm3381, %v3376, %v3192
        %v3386 = vsel %vm3381, %v3377, %v3194
        %v3387 = vsel %vm3381, %v3378, %v3196
        %v3388 = vsel %vm3381, %v3379, %v3198
        %v3389 = vsel %vm3381, %v3380, %v3200
        %vm3390 = vcmask 228352
        %v3391 = vsel %vm3390, %v3382, %v3218
        %v3392 = vsel %vm3390, %v3383, %v3220
        %v3393 = vsel %vm3390, %v3384, %v3222
        %v3394 = vsel %vm3390, %v3385, %v3224
        %v3395 = vsel %vm3390, %v3386, %v3226
        %v3396 = vsel %vm3390, %v3387, %v3228
        %v3397 = vsel %vm3390, %v3388, %v3230
        %v3398 = vsel %vm3390, %v3389, %v3232
        %vm3399 = vcmask 244736
        %v3400 = vsel %vm3399, %v3391, %v3250
        %v3401 = vsel %vm3399, %v3392, %v3252
        %v3402 = vsel %vm3399, %v3393, %v3254
        %v3403 = vsel %vm3399, %v3394, %v3256
        %v3404 = vsel %vm3399, %v3395, %v3258
        %v3405 = vsel %vm3399, %v3396, %v3260
        %v3406 = vsel %vm3399, %v3397, %v3262
        %v3407 = vsel %vm3399, %v3398, %v3264
        %3416 = vrot.lane.b32.xlu0 %v3400, 32
        %v3417 = vpop.permute.xlu0 %3416
        %3418 = vrot.lane.b32.xlu0 %v3401, 32
        %v3419 = vpop.permute.xlu0 %3418
        %3420 = vrot.lane.b32.xlu0 %v3402, 32
        %v3421 = vpop.permute.xlu0 %3420
        %3422 = vrot.lane.b32.xlu0 %v3403, 32
        %v3423 = vpop.permute.xlu0 %3422
        %3424 = vrot.lane.b32.xlu0 %v3404, 32
        %v3425 = vpop.permute.xlu0 %3424
        %3426 = vrot.lane.b32.xlu0 %v3405, 32
        %v3427 = vpop.permute.xlu0 %3426
        %3428 = vrot.lane.b32.xlu0 %v3406, 32
        %v3429 = vpop.permute.xlu0 %3428
        %3430 = vrot.lane.b32.xlu0 %v3407, 32
        %v3431 = vpop.permute.xlu0 %3430
        %vm3440 = vcmask 261120
        %v3441 = vsel %vm3440, %v3400, %v3417
        %v3442 = vsel %vm3440, %v3401, %v3419
        %v3443 = vsel %vm3440, %v3402, %v3421
        %v3444 = vsel %vm3440, %v3403, %v3423
        %v3445 = vsel %vm3440, %v3404, %v3425
        %v3446 = vsel %vm3440, %v3405, %v3427
        %v3447 = vsel %vm3440, %v3406, %v3429
        %v3448 = vsel %vm3440, %v3407, %v3431
        %vm3449 = vcmask 523264
        %3450 = vst.msk [vmem:[%s155] sm:$0xff] %vm3449, %v3441
        %3451 = vst.msk [vmem:[%s155 + $0x8] sm:$0xff] %vm3449, %v3442
        %3452 = vst.msk [vmem:[%s155 + $0x10] sm:$0xff] %vm3449, %v3443
        %3453 = vst.msk [vmem:[%s155 + $0x18] sm:$0xff] %vm3449, %v3444
        %3454 = vst.msk [vmem:[%s155 + $0x20] sm:$0xff] %vm3449, %v3445
        %3455 = vst.msk [vmem:[%s155 + $0x28] sm:$0xff] %vm3449, %v3446
        %3456 = vst.msk [vmem:[%s155 + $0x30] sm:$0xff] %vm3449, %v3447
        %3457 = vst.msk [vmem:[%s155 + $0x38] sm:$0xff] %vm3449, %v3448
        %s3458 = sand.u32 %s68, 1
        %s3459 = scalar_lea.sflag [#allocation4], %s3458
        %s3460 = sand.u32 %s68, 1
        %s3461 = smul.addr %s3460, 64
        %s3462 = scalar_lea.vmem [#allocation5], %s3461
        // Predicated region
        $region29: #{tpu_custom_call.1} parent=23 // pred_check
          %p3463 = pneg %p78
        $region30: #{tpu_custom_call.1} parent=23 // pred_check_branch
          %3465 = sbr.rel (%p3463) target = $region32
        $region31: #{tpu_custom_call.1} parent=23 // pred_region
          %s3466 = smul.u32 4, %s22
          %s3467 = smul.u32 2, %s23
          %3469 = vsyncadd %s3459, 0
          %s3470 = smul.addr %s3466, 2
          %s3471 = sadd.s32 %s3467, %s3470
          %s3472 = smul.addr %s3471, 8
          %s3473 = scalar_lea.hbm %s1, %s3472
          %s3474 = sshll.u32 %s3462, 4
          %s3475 = int_to_ptr.vmem [resolvable:$true] %s3474
          %s3476 = sshll.u32 %s3473, 4
          %s3477 = int_to_ptr.hbm [resolvable:$true] %s3476
          %3482 = dma.vmem_to_hbm [thread:$0]  %s3475, 1024, %s3477, %s3459, 128, 128, 8
        $region32: #{tpu_custom_call.1} parent=23 // pred_fallthru
          _
      $region24: #{tpu_custom_call.1} parent=5 // pred_fallthru
        _
      %p3483 = scmp.le.s32.totalorder 2, %s13
      // Predicated region
      $region33: #{tpu_custom_call.1} parent=5 // pred_check
        %p3484 = pneg %p3483
      $region34: #{tpu_custom_call.1} parent=5 // pred_check_branch
        %3486 = sbr.rel (%p3484) target = $region36
      $region35: #{tpu_custom_call.1} parent=5 // pred_region
        %s3487 = ssub.s32 %s13, 2
        // Predicated region
        $region37: #{tpu_custom_call.1} parent=35 // pred_check
          %p3488 = pneg %p84
        $region38: #{tpu_custom_call.1} parent=35 // pred_check_branch
          %3490 = sbr.rel (%p3488) target = $region40
        $region39: #{tpu_custom_call.1} parent=35 // pred_region
          %s3491 = sand.u32 %s69, 1
          %s3492 = scalar_lea.sflag [#allocation4], %s3491
          %s3493 = sand.u32 %s69, 1
          %s3494 = smul.addr %s3493, 64
          %s3495 = scalar_lea.vmem [#allocation5], %s3494
          %3497 = dma.done %s3492, 1024
        $region40: #{tpu_custom_call.1} parent=35 // pred_fallthru
          _
      $region36: #{tpu_custom_call.1} parent=5 // pred_fallthru
        _
    $region6: #{tpu_custom_call.1} parent=1 // loop_footer
      %s17 = sadd.s32 1, %s13
    $region7: #{tpu_custom_call.1} parent=1 // loop_footer_branch
      %12 = sbr.rel target = $region3
    $region8: #{tpu_custom_call.1} parent=1 // loop_exit
      _
    %3498 = vsyncpa [#allocation3], 1
    %s3499 = scalar_lea.sflag [#allocation3], 1
    %3500 = vsyncpa %s3499, 1
    %3501 = vsyncpa [#allocation4], 1
    %s3502 = scalar_lea.sflag [#allocation4], 1
    %3503 = vsyncpa %s3502, 1

</llo_original>
